<compile_context>
chip_gen: v7x
topology: tpu7x:2x2x1
jax: 0.10.0
libtpu: 0.0.40
codegen_flags: <defaults>
</compile_context>

<pallas_src>
import functools
import math

import jax
import jax.numpy as jnp
from jax import lax
from jax.experimental import pallas as pl
from jax.experimental.pallas import tpu as pltpu


# k_size -> (k0, k_spatial, dilation); pads derived: p0=(k0-1)//2, ps=d*(ks-1)//2
_LKA_CFG = {
    7: (3, 3, 2),
    11: (3, 5, 2),
    23: (5, 7, 3),
    35: (5, 11, 3),
    41: (5, 13, 3),
    53: (5, 17, 3),
}


def _shift_w(win, off):
    """out[:, x, :] = win[:, x + off, :]; zero where x + off is out of range (static off)."""
    if off == 0:
        return win
    r, w, c = win.shape
    fill = jnp.zeros((r, abs(off), c), win.dtype)
    if off > 0:
        return jnp.concatenate([win[:, off:, :], fill], axis=1)
    return jnp.concatenate([fill, win[:, :w + off, :]], axis=1)


def _lka_kernel(x_hbm, w0_ref, b0_ref, ws_ref, bs_ref, w1_ref, b1_ref,
                o_ref, xband_ref, a0pad_ref, dma_sems, *,
                k0, ks, dil, p0, ps, halo, h_img):
    """One (batch, H-tile) per grid step; the whole LKA chain stays VMEM resident."""
    th, w, c = o_ref.shape[1], o_ref.shape[2], o_ref.shape[3]
    band_a0 = th + 2 * ps                       # conv0-output rows needed for this tile
    b = pl.program_id(0)
    h = pl.program_id(1)
    nh = pl.num_programs(1)
    row0 = h * th                               # first output row of this tile

    # ---- fetch the x row band (tile + conv halo) HBM -> VMEM ------------------
    core_cp = pltpu.make_async_copy(
        x_hbm.at[b, pl.ds(row0, th)], xband_ref.at[halo:halo + th], dma_sems.at[0])
    core_cp.start()

    @pl.when(h > 0)
    def _():
        pltpu.make_async_copy(x_hbm.at[b, pl.ds(row0 - halo, halo)],
                              xband_ref.at[0:halo], dma_sems.at[1]).start()

    @pl.when(h < nh - 1)
    def _():
        pltpu.make_async_copy(x_hbm.at[b, pl.ds(row0 + th, halo)],
                              xband_ref.at[halo + th:halo + th + halo],
                              dma_sems.at[2]).start()

    # Band rows outside the image are conv zero padding; only these thin strips
    # are ever zero-filled (and only on boundary tiles), overlapped with the DMAs.
    @pl.when(h == 0)
    def _():
        xband_ref[0:halo, :, :] = jnp.zeros((halo, w, c), jnp.float32)

    @pl.when(h == nh - 1)
    def _():
        xband_ref[halo + th:halo + th + halo, :, :] = jnp.zeros((halo, w, c), jnp.float32)

    core_cp.wait()

    @pl.when(h > 0)
    def _():
        pltpu.make_async_copy(x_hbm.at[b, pl.ds(row0 - halo, halo)],
                              xband_ref.at[0:halo], dma_sems.at[1]).wait()

    @pl.when(h < nh - 1)
    def _():
        pltpu.make_async_copy(x_hbm.at[b, pl.ds(row0 + th, halo)],
                              xband_ref.at[halo + th:halo + th + halo],
                              dma_sems.at[2]).wait()

    # ---- conv0: k0 x k0 depthwise over the band --------------------------------
    # Accumulator starts at the broadcast bias (no trailing "+ b0" pass); one band
    # load per kernel row, W shifts via static concat-with-zeros (no xpad scratch).
    w0 = w0_ref[...]                                       # (k0, k0, C), loaded once
    acc0 = jnp.broadcast_to(b0_ref[0, :], (band_a0, w, c))
    for i in range(k0):
        row_band = xband_ref[i:i + band_a0, :, :]          # (band_a0, W, C)
        for j in range(k0):
            acc0 = acc0 + _shift_w(row_band, j - p0) * w0[i, j, :]

    # conv_spatial zero-pads conv0's *output*: band rows outside the image must be
    # literal zeros (not "conv0 of zero-padded x"), so mask by global row index.
    grow = lax.broadcasted_iota(jnp.int32, (band_a0, w, c), 0) + (row0 - ps)
    acc0 = jnp.where((grow >= 0) & (grow < h_img), acc0, 0.0)

    # Stage the band into the W-padded scratch for conv_spatial's shifted reads
    # (thin ps-wide side strips are the only zero fill here).
    a0pad_ref[:, 0:ps, :] = jnp.zeros((band_a0, ps, c), jnp.float32)
    a0pad_ref[:, ps + w:2 * ps + w, :] = jnp.zeros((band_a0, ps, c), jnp.float32)
    a0pad_ref[:, ps:ps + w, :] = acc0

    # ---- conv_spatial: ks x ks depthwise, dilation dil --------------------------
    # fori_loop over kernel rows keeps instruction count / vreg live ranges bounded
    # for the large k_size configs; small kernels get fully unrolled.
    def row_body(i, acc):
        wrow = ws_ref[i]                                   # (ks, C), dynamic row load
        r0 = i * dil
        for j in range(ks):
            win = a0pad_ref[pl.ds(r0, th), pl.ds(j * dil, w), :]
            acc = acc + win * wrow[j, :]
        return acc

    acc1 = lax.fori_loop(0, ks, row_body,
                         jnp.broadcast_to(bs_ref[0, :], (th, w, c)),
                         unroll=(ks <= 7))

    # ---- conv1 (dense 1x1) on the MXU in bf16; bias + u*attn gate in epilogue ---
    u = xband_ref[halo:halo + th, :, :]                    # the tile itself is the gate
    attn = jnp.dot(acc1.reshape(th * w, c).astype(jnp.bfloat16), w1_ref[...],
                   preferred_element_type=jnp.float32)
    attn = attn + b1_ref[0, :]
    o_ref[0] = (u.reshape(th * w, c) * attn).reshape(th, w, c).astype(o_ref.dtype)


def lka_forward_nhwc(x, params, k_size, *, tile_h=None):
    """Fused LKA forward, channels-last. x: (B, H, W, C) f32 -> (B, H, W, C).

    Keeping the surrounding model NHWC end-to-end avoids the NCHW<->NHWC
    transposes that would otherwise add two full-tensor HBM round trips.
    """
    k0, ks, dil = _LKA_CFG[k_size]
    p0 = (k0 - 1) // 2
    ps = dil * (ks - 1) // 2
    halo = p0 + ps

    x = x.astype(jnp.float32)
    B, H, W, C = x.shape
    if C % 128 != 0 or W % 8 != 0:
        raise ValueError("need C % 128 == 0 (lanes) and W % 8 == 0 (sublanes)")

    if tile_h is None:
        # Aim for ~8 MiB of f32 band/out blocks per step: safe under v5e's 16 MiB
        # scoped-VMEM default and well under v7x's 64 MiB physical VMEM.
        budget_rows = max(1, (8 * 1024 * 1024) // (5 * 4 * W * C))
        tile_h = H
        for cand in range(min(H, budget_rows), 0, -1):
            if H % cand == 0 and cand >= halo:
                tile_h = cand
                break
    nh = H // tile_h
    if H % tile_h != 0:
        raise ValueError(f"tile_h={tile_h} must divide H={H}")
    if nh > 1 and tile_h < halo:
        raise ValueError(f"tile_h={tile_h} must be >= halo={halo} when H is tiled")

    band = tile_h + 2 * halo          # x rows resident per step
    band_a0 = tile_h + 2 * ps         # conv0-output rows per step

    # Per-step VMEM footprint (scratch bands + double-buffered output block).
    est = 4 * (band * W * C + band_a0 * (W + 2 * ps) * C + 2 * tile_h * W * C)
    est += 4 * (k0 * k0 + ks * ks + 3) * C + 2 * C * C
    vmem_limit = int(min(48 * 1024 * 1024, max(32 * 1024 * 1024, 2 * est)))

    kernel = functools.partial(
        _lka_kernel, k0=k0, ks=ks, dil=dil, p0=p0, ps=ps, halo=halo, h_img=H)

    return pl.pallas_call(
        kernel,
        out_shape=jax.ShapeDtypeStruct((B, H, W, C), jnp.float32),
        grid=(B, nh),
        in_specs=[
            pl.BlockSpec(memory_space=pl.ANY),                    # x stays in HBM
            pl.BlockSpec((k0, k0, C), lambda b, h: (0, 0, 0)),    # conv0 weight
            pl.BlockSpec((1, C), lambda b, h: (0, 0)),            # conv0 bias
            pl.BlockSpec((ks, ks, C), lambda b, h: (0, 0, 0)),    # conv_spatial weight
            pl.BlockSpec((1, C), lambda b, h: (0, 0)),            # conv_spatial bias
            pl.BlockSpec((C, C), lambda b, h: (0, 0)),            # conv1 weight (bf16)
            pl.BlockSpec((1, C), lambda b, h: (0, 0)),            # conv1 bias
        ],
        out_specs=pl.BlockSpec((1, tile_h, W, C), lambda b, h: (b, h, 0, 0)),
        scratch_shapes=[
            pltpu.VMEM((band, W, C), jnp.float32),                # x row band (+halo)
            pltpu.VMEM((band_a0, W + 2 * ps, C), jnp.float32),    # conv0 out band, W-padded
            pltpu.SemaphoreType.DMA((3,)),
        ],
        compiler_params=pltpu.CompilerParams(
            dimension_semantics=("parallel", "parallel"),
            vmem_limit_bytes=vmem_limit),
    )(x,
      params["w0"], params["b0"].reshape(1, C),
      params["ws"], params["bs"].reshape(1, C),
      params["w1"].astype(jnp.bfloat16), params["b1"].reshape(1, C))


# ----------------------------------------------------------------------------
# pure-XLA NHWC reference (same math as the torch module) for verification
# ----------------------------------------------------------------------------
def lka_reference_nhwc(x, params, k_size):
    k0, ks, dil = _LKA_CFG[k_size]
    p0 = (k0 - 1) // 2
    ps = dil * (ks - 1) // 2
    C = x.shape[-1]
    dn = ("NHWC", "HWIO", "NHWC")
    hi = lax.Precision.HIGHEST
    w0 = params["w0"][:, :, None, :]      # depthwise HWIO: (k0, k0, 1, C)
    ws = params["ws"][:, :, None, :]
    w1 = params["w1"][None, None, :, :]   # 1x1 HWIO: (1, 1, Cin, Cout)

    a = lax.conv_general_dilated(x, w0, (1, 1), [(p0, p0), (p0, p0)],
                                 dimension_numbers=dn, feature_group_count=C, precision=hi)
    a = a + params["b0"]
    a = lax.conv_general_dilated(a, ws, (1, 1), [(ps, ps), (ps, ps)],
                                 rhs_dilation=(dil, dil),
                                 dimension_numbers=dn, feature_group_count=C, precision=hi)
    a = a + params["bs"]
    a = lax.conv_general_dilated(a, w1, (1, 1), [(0, 0), (0, 0)],
                                 dimension_numbers=dn, precision=hi)
    a = a + params["b1"]
    return x * a


def init_params(dim, k_size, key):
    k0, ks, _ = _LKA_CFG[k_size]
    kk = jax.random.split(key, 6)
    return dict(
        w0=0.2 * jax.random.normal(kk[0], (k0, k0, dim), jnp.float32),
        b0=0.1 * jax.random.normal(kk[1], (dim,), jnp.float32),
        ws=0.2 * jax.random.normal(kk[2], (ks, ks, dim), jnp.float32),
        bs=0.1 * jax.random.normal(kk[3], (dim,), jnp.float32),
        w1=jax.random.normal(kk[4], (dim, dim), jnp.float32) / math.sqrt(dim),
        b1=0.1 * jax.random.normal(kk[5], (dim,), jnp.float32),
    )


# ----------------------------------------------------------------------------
if __name__ == "__main__":
    K_SIZE = 7
    B, DIM, H, W = 2, 128, 16, 16            # NHWC; dim=128 -> lane-dense channels

    key = jax.random.PRNGKey(0)
    kx, kp = jax.random.split(key)
    x = jax.random.normal(kx, (B, H, W, DIM), jnp.float32)
    params = init_params(DIM, K_SIZE, kp)

    ref = jax.block_until_ready(lka_reference_nhwc(x, params, K_SIZE))

    # tile_h=4 exercises interior tiles (both halo DMAs), 8 exercises one-sided
    # boundaries, 16 the single-tile (both halos zeroed) path.
    for tile_h in (4, 8, 16):
        fwd = jax.jit(functools.partial(lka_forward_nhwc, k_size=K_SIZE, tile_h=tile_h))
        out = jax.block_until_ready(fwd(x, params))
        assert out.shape == (B, H, W, DIM), out.shape
        assert bool(jnp.all(jnp.isfinite(out)))
        err = jnp.abs(out - ref)
        max_err = float(jnp.max(err))
        mean_err = float(jnp.mean(err))
        # bf16 MXU operands for the 1x1 conv add ~1e-3-level noise vs f32 reference.
        assert max_err < 5e-2 and mean_err < 3e-3, (tile_h, max_err, mean_err)

    print("KERNEL_OK")
</pallas_src>

<mosaic_0001>
module attributes {stable_mosaic.version = 11 : i64} {
  func.func @_lka_kernel(%arg0: i32, %arg1: i32, %arg2: memref<2x16x16x128xf32, #tpu.memory_space<any>>, %arg3: memref<3x3x128xf32, #tpu.memory_space<vmem>>, %arg4: memref<1x128xf32, #tpu.memory_space<vmem>>, %arg5: memref<3x3x128xf32, #tpu.memory_space<vmem>>, %arg6: memref<1x128xf32, #tpu.memory_space<vmem>>, %arg7: memref<128x128xbf16, #tpu.memory_space<vmem>>, %arg8: memref<1x128xf32, #tpu.memory_space<vmem>>, %arg9: memref<1x4x16x128xf32, #tpu.memory_space<vmem>>, %arg10: memref<10x16x128xf32, #tpu.memory_space<vmem>>, %arg11: memref<8x20x128xf32, #tpu.memory_space<vmem>>, %arg12: memref<3x!tpu.dma_semaphore, #tpu.memory_space<semaphore_mem>>) attributes {dimension_semantics = [#tpu.dimension_semantics<parallel>, #tpu.dimension_semantics<parallel>], iteration_bounds = array<i64: 2, 4>, scalar_prefetch = 0 : i64, scratch_operands = 3 : i64, tpu.core_type = #tpu.core_type<tc>, window_params = [{}, {pipeline_mode = #tpu.pipeline_mode<synchronous>, transform_indices = @transform_1, window_bounds = array<i64: 3, 3, 128>}, {pipeline_mode = #tpu.pipeline_mode<synchronous>, transform_indices = @transform_2, window_bounds = array<i64: 1, 128>}, {pipeline_mode = #tpu.pipeline_mode<synchronous>, transform_indices = @transform_3, window_bounds = array<i64: 3, 3, 128>}, {pipeline_mode = #tpu.pipeline_mode<synchronous>, transform_indices = @transform_4, window_bounds = array<i64: 1, 128>}, {pipeline_mode = #tpu.pipeline_mode<synchronous>, transform_indices = @transform_5, window_bounds = array<i64: 128, 128>}, {pipeline_mode = #tpu.pipeline_mode<synchronous>, transform_indices = @transform_6, window_bounds = array<i64: 1, 128>}, {transform_indices = @transform_7, window_bounds = array<i64: 1, 4, 16, 128>}]} {
    %c4_i32 = arith.constant 4 : i32
    %0 = arith.muli %arg1, %c4_i32 : i32
    %c0_i32 = arith.constant 0 : i32
    %c0_i32_0 = arith.constant 0 : i32
    %c0_i32_1 = arith.constant 0 : i32
    %1 = tpu.memref_slice %arg2[%arg0, %0, %c0_i32_0, %c0_i32_1] : memref<2x16x16x128xf32, #tpu.memory_space<any>> -> memref<1x4x16x128xf32, #tpu.memory_space<any>>
    %2 = tpu.memref_squeeze %1 : memref<1x4x16x128xf32, #tpu.memory_space<any>> -> memref<4x16x128xf32, #tpu.memory_space<any>>
    %c3_i32 = arith.constant 3 : i32
    %c0_i32_2 = arith.constant 0 : i32
    %c0_i32_3 = arith.constant 0 : i32
    %3 = tpu.memref_slice %arg10[%c3_i32, %c0_i32_2, %c0_i32_3] : memref<10x16x128xf32, #tpu.memory_space<vmem>> -> memref<4x16x128xf32, #tpu.memory_space<vmem>>
    %4 = tpu.memref_slice %arg12[%c0_i32] : memref<3x!tpu.dma_semaphore, #tpu.memory_space<semaphore_mem>> -> memref<1x!tpu.dma_semaphore, #tpu.memory_space<semaphore_mem>>
    %5 = tpu.memref_squeeze %4 : memref<1x!tpu.dma_semaphore, #tpu.memory_space<semaphore_mem>> -> memref<!tpu.dma_semaphore, #tpu.memory_space<semaphore_mem>>
    tpu.enqueue_dma source(%2 : memref<4x16x128xf32, #tpu.memory_space<any>>) target(%3 : memref<4x16x128xf32, #tpu.memory_space<vmem>>) target_semaphore(%5 : memref<!tpu.dma_semaphore, #tpu.memory_space<semaphore_mem>>)
    %c0_i32_4 = arith.constant 0 : i32
    %6 = arith.cmpi sgt, %arg1, %c0_i32_4 : i32
    %7 = arith.extui %6 : i1 to i32
    %c0_i32_5 = arith.constant 0 : i32
    %8 = arith.cmpi ne, %7, %c0_i32_5 : i32
    scf.if %8 {
      %c3_i32_92 = arith.constant 3 : i32
      %229 = arith.subi %0, %c3_i32_92 : i32
      %c1_i32_93 = arith.constant 1 : i32
      %c0_i32_94 = arith.constant 0 : i32
      %c0_i32_95 = arith.constant 0 : i32
      %230 = tpu.memref_slice %arg2[%arg0, %229, %c0_i32_94, %c0_i32_95] : memref<2x16x16x128xf32, #tpu.memory_space<any>> -> memref<1x3x16x128xf32, #tpu.memory_space<any>>
      %231 = tpu.memref_squeeze %230 : memref<1x3x16x128xf32, #tpu.memory_space<any>> -> memref<3x16x128xf32, #tpu.memory_space<any>>
      %c0_i32_96 = arith.constant 0 : i32
      %c0_i32_97 = arith.constant 0 : i32
      %c0_i32_98 = arith.constant 0 : i32
      %232 = tpu.memref_slice %arg10[%c0_i32_96, %c0_i32_97, %c0_i32_98] : memref<10x16x128xf32, #tpu.memory_space<vmem>> -> memref<3x16x128xf32, #tpu.memory_space<vmem>>
      %233 = tpu.memref_slice %arg12[%c1_i32_93] : memref<3x!tpu.dma_semaphore, #tpu.memory_space<semaphore_mem>> -> memref<1x!tpu.dma_semaphore, #tpu.memory_space<semaphore_mem>>
      %234 = tpu.memref_squeeze %233 : memref<1x!tpu.dma_semaphore, #tpu.memory_space<semaphore_mem>> -> memref<!tpu.dma_semaphore, #tpu.memory_space<semaphore_mem>>
      tpu.enqueue_dma source(%231 : memref<3x16x128xf32, #tpu.memory_space<any>>) target(%232 : memref<3x16x128xf32, #tpu.memory_space<vmem>>) target_semaphore(%234 : memref<!tpu.dma_semaphore, #tpu.memory_space<semaphore_mem>>)
    } else {
    }
    %c3_i32_6 = arith.constant 3 : i32
    %9 = arith.cmpi slt, %arg1, %c3_i32_6 : i32
    %10 = arith.extui %9 : i1 to i32
    %c0_i32_7 = arith.constant 0 : i32
    %11 = arith.cmpi ne, %10, %c0_i32_7 : i32
    scf.if %11 {
      %c4_i32_92 = arith.constant 4 : i32
      %229 = arith.addi %0, %c4_i32_92 : i32
      %c2_i32_93 = arith.constant 2 : i32
      %c0_i32_94 = arith.constant 0 : i32
      %c0_i32_95 = arith.constant 0 : i32
      %230 = tpu.memref_slice %arg2[%arg0, %229, %c0_i32_94, %c0_i32_95] : memref<2x16x16x128xf32, #tpu.memory_space<any>> -> memref<1x3x16x128xf32, #tpu.memory_space<any>>
      %231 = tpu.memref_squeeze %230 : memref<1x3x16x128xf32, #tpu.memory_space<any>> -> memref<3x16x128xf32, #tpu.memory_space<any>>
      %c7_i32 = arith.constant 7 : i32
      %c0_i32_96 = arith.constant 0 : i32
      %c0_i32_97 = arith.constant 0 : i32
      %232 = tpu.memref_slice %arg10[%c7_i32, %c0_i32_96, %c0_i32_97] : memref<10x16x128xf32, #tpu.memory_space<vmem>> -> memref<3x16x128xf32, #tpu.memory_space<vmem>>
      %233 = tpu.memref_slice %arg12[%c2_i32_93] : memref<3x!tpu.dma_semaphore, #tpu.memory_space<semaphore_mem>> -> memref<1x!tpu.dma_semaphore, #tpu.memory_space<semaphore_mem>>
      %234 = tpu.memref_squeeze %233 : memref<1x!tpu.dma_semaphore, #tpu.memory_space<semaphore_mem>> -> memref<!tpu.dma_semaphore, #tpu.memory_space<semaphore_mem>>
      tpu.enqueue_dma source(%231 : memref<3x16x128xf32, #tpu.memory_space<any>>) target(%232 : memref<3x16x128xf32, #tpu.memory_space<vmem>>) target_semaphore(%234 : memref<!tpu.dma_semaphore, #tpu.memory_space<semaphore_mem>>)
    } else {
    }
    %c0_i32_8 = arith.constant 0 : i32
    %12 = arith.cmpi eq, %arg1, %c0_i32_8 : i32
    %13 = arith.extui %12 : i1 to i32
    %c0_i32_9 = arith.constant 0 : i32
    %14 = arith.cmpi ne, %13, %c0_i32_9 : i32
    scf.if %14 {
      %cst_92 = arith.constant 0.000000e+00 : f32
      %229 = vector.broadcast %cst_92 : f32 to vector<3x16x128xf32>
      %c0_93 = arith.constant 0 : index
      %c0_94 = arith.constant 0 : index
      %c0_95 = arith.constant 0 : index
      %230 = vector.load %arg10[%c0_93, %c0_94, %c0_95] : memref<10x16x128xf32, #tpu.memory_space<vmem>>, vector<3x16x128xf32>
      tpu.vector_store %arg10[%c0_93, %c0_94, %c0_95], %229 {strides = array<i32>} : memref<10x16x128xf32, #tpu.memory_space<vmem>>, vector<3x16x128xf32>,
    } else {
    }
    %c3_i32_10 = arith.constant 3 : i32
    %15 = arith.cmpi eq, %arg1, %c3_i32_10 : i32
    %16 = arith.extui %15 : i1 to i32
    %c0_i32_11 = arith.constant 0 : i32
    %17 = arith.cmpi ne, %16, %c0_i32_11 : i32
    scf.if %17 {
      %cst_92 = arith.constant 0.000000e+00 : f32
      %229 = vector.broadcast %cst_92 : f32 to vector<3x16x128xf32>
      %c7 = arith.constant 7 : index
      %c0_93 = arith.constant 0 : index
      %c0_94 = arith.constant 0 : index
      %230 = vector.load %arg10[%c7, %c0_93, %c0_94] : memref<10x16x128xf32, #tpu.memory_space<vmem>>, vector<3x16x128xf32>
      tpu.vector_store %arg10[%c7, %c0_93, %c0_94], %229 {strides = array<i32>} : memref<10x16x128xf32, #tpu.memory_space<vmem>>, vector<3x16x128xf32>,
    } else {
    }
    %c0_i32_12 = arith.constant 0 : i32
    %c0_i32_13 = arith.constant 0 : i32
    %c0_i32_14 = arith.constant 0 : i32
    %18 = tpu.memref_slice %arg2[%arg0, %0, %c0_i32_13, %c0_i32_14] : memref<2x16x16x128xf32, #tpu.memory_space<any>> -> memref<1x4x16x128xf32, #tpu.memory_space<any>>
    %19 = tpu.memref_squeeze %18 : memref<1x4x16x128xf32, #tpu.memory_space<any>> -> memref<4x16x128xf32, #tpu.memory_space<any>>
    %c3_i32_15 = arith.constant 3 : i32
    %c0_i32_16 = arith.constant 0 : i32
    %c0_i32_17 = arith.constant 0 : i32
    %20 = tpu.memref_slice %arg10[%c3_i32_15, %c0_i32_16, %c0_i32_17] : memref<10x16x128xf32, #tpu.memory_space<vmem>> -> memref<4x16x128xf32, #tpu.memory_space<vmem>>
    %21 = tpu.memref_slice %arg12[%c0_i32_12] : memref<3x!tpu.dma_semaphore, #tpu.memory_space<semaphore_mem>> -> memref<1x!tpu.dma_semaphore, #tpu.memory_space<semaphore_mem>>
    %22 = tpu.memref_squeeze %21 : memref<1x!tpu.dma_semaphore, #tpu.memory_space<semaphore_mem>> -> memref<!tpu.dma_semaphore, #tpu.memory_space<semaphore_mem>>
    tpu.wait_dma2 semaphore(%22 : memref<!tpu.dma_semaphore, #tpu.memory_space<semaphore_mem>>) src(%19 : memref<4x16x128xf32, #tpu.memory_space<any>>) dst(%20 : memref<4x16x128xf32, #tpu.memory_space<vmem>>)
    %c0_i32_18 = arith.constant 0 : i32
    %23 = arith.cmpi sgt, %arg1, %c0_i32_18 : i32
    %24 = arith.extui %23 : i1 to i32
    %c0_i32_19 = arith.constant 0 : i32
    %25 = arith.cmpi ne, %24, %c0_i32_19 : i32
    scf.if %25 {
      %c3_i32_92 = arith.constant 3 : i32
      %229 = arith.subi %0, %c3_i32_92 : i32
      %c1_i32_93 = arith.constant 1 : i32
      %c0_i32_94 = arith.constant 0 : i32
      %c0_i32_95 = arith.constant 0 : i32
      %230 = tpu.memref_slice %arg2[%arg0, %229, %c0_i32_94, %c0_i32_95] : memref<2x16x16x128xf32, #tpu.memory_space<any>> -> memref<1x3x16x128xf32, #tpu.memory_space<any>>
      %231 = tpu.memref_squeeze %230 : memref<1x3x16x128xf32, #tpu.memory_space<any>> -> memref<3x16x128xf32, #tpu.memory_space<any>>
      %c0_i32_96 = arith.constant 0 : i32
      %c0_i32_97 = arith.constant 0 : i32
      %c0_i32_98 = arith.constant 0 : i32
      %232 = tpu.memref_slice %arg10[%c0_i32_96, %c0_i32_97, %c0_i32_98] : memref<10x16x128xf32, #tpu.memory_space<vmem>> -> memref<3x16x128xf32, #tpu.memory_space<vmem>>
      %233 = tpu.memref_slice %arg12[%c1_i32_93] : memref<3x!tpu.dma_semaphore, #tpu.memory_space<semaphore_mem>> -> memref<1x!tpu.dma_semaphore, #tpu.memory_space<semaphore_mem>>
      %234 = tpu.memref_squeeze %233 : memref<1x!tpu.dma_semaphore, #tpu.memory_space<semaphore_mem>> -> memref<!tpu.dma_semaphore, #tpu.memory_space<semaphore_mem>>
      tpu.wait_dma2 semaphore(%234 : memref<!tpu.dma_semaphore, #tpu.memory_space<semaphore_mem>>) src(%231 : memref<3x16x128xf32, #tpu.memory_space<any>>) dst(%232 : memref<3x16x128xf32, #tpu.memory_space<vmem>>)
    } else {
    }
    %c3_i32_20 = arith.constant 3 : i32
    %26 = arith.cmpi slt, %arg1, %c3_i32_20 : i32
    %27 = arith.extui %26 : i1 to i32
    %c0_i32_21 = arith.constant 0 : i32
    %28 = arith.cmpi ne, %27, %c0_i32_21 : i32
    scf.if %28 {
      %c4_i32_92 = arith.constant 4 : i32
      %229 = arith.addi %0, %c4_i32_92 : i32
      %c2_i32_93 = arith.constant 2 : i32
      %c0_i32_94 = arith.constant 0 : i32
      %c0_i32_95 = arith.constant 0 : i32
      %230 = tpu.memref_slice %arg2[%arg0, %229, %c0_i32_94, %c0_i32_95] : memref<2x16x16x128xf32, #tpu.memory_space<any>> -> memref<1x3x16x128xf32, #tpu.memory_space<any>>
      %231 = tpu.memref_squeeze %230 : memref<1x3x16x128xf32, #tpu.memory_space<any>> -> memref<3x16x128xf32, #tpu.memory_space<any>>
      %c7_i32 = arith.constant 7 : i32
      %c0_i32_96 = arith.constant 0 : i32
      %c0_i32_97 = arith.constant 0 : i32
      %232 = tpu.memref_slice %arg10[%c7_i32, %c0_i32_96, %c0_i32_97] : memref<10x16x128xf32, #tpu.memory_space<vmem>> -> memref<3x16x128xf32, #tpu.memory_space<vmem>>
      %233 = tpu.memref_slice %arg12[%c2_i32_93] : memref<3x!tpu.dma_semaphore, #tpu.memory_space<semaphore_mem>> -> memref<1x!tpu.dma_semaphore, #tpu.memory_space<semaphore_mem>>
      %234 = tpu.memref_squeeze %233 : memref<1x!tpu.dma_semaphore, #tpu.memory_space<semaphore_mem>> -> memref<!tpu.dma_semaphore, #tpu.memory_space<semaphore_mem>>
      tpu.wait_dma2 semaphore(%234 : memref<!tpu.dma_semaphore, #tpu.memory_space<semaphore_mem>>) src(%231 : memref<3x16x128xf32, #tpu.memory_space<any>>) dst(%232 : memref<3x16x128xf32, #tpu.memory_space<vmem>>)
    } else {
    }
    %c0 = arith.constant 0 : index
    %c0_22 = arith.constant 0 : index
    %c0_23 = arith.constant 0 : index
    %29 = vector.load %arg3[%c0, %c0_22, %c0_23] : memref<3x3x128xf32, #tpu.memory_space<vmem>>, vector<3x3x128xf32>
    %c0_24 = arith.constant 0 : index
    %c0_25 = arith.constant 0 : index
    %30 = vector.load %arg4[%c0_24, %c0_25] : memref<1x128xf32, #tpu.memory_space<vmem>>, vector<1x128xf32>
    %31 = vector.shape_cast %30 : vector<1x128xf32> to vector<128xf32>
    %32 = vector.shape_cast %31 : vector<128xf32> to vector<1x1x128xf32>
    %33 = vector.broadcast %32 : vector<1x1x128xf32> to vector<8x16x128xf32>
    %c0_26 = arith.constant 0 : index
    %c0_27 = arith.constant 0 : index
    %c0_28 = arith.constant 0 : index
    %34 = vector.load %arg10[%c0_26, %c0_27, %c0_28] : memref<10x16x128xf32, #tpu.memory_space<vmem>>, vector<8x16x128xf32>
    %cst = arith.constant 0.000000e+00 : f32
    %35 = vector.broadcast %cst : f32 to vector<8x1x128xf32>
    %36 = vector.extract_strided_slice %34 {offsets = [0, 0, 0], sizes = [8, 15, 128], strides = [1, 1, 1]} : vector<8x16x128xf32> to vector<8x15x128xf32>
    %37 = tpu.concatenate %35, %36 in 1 : vector<8x1x128xf32>, vector<8x15x128xf32> -> vector<8x16x128xf32>
    %38 = vector.extract_strided_slice %29 {offsets = [0, 0, 0], sizes = [1, 1, 128], strides = [1, 1, 1]} : vector<3x3x128xf32> to vector<1x1x128xf32>
    %39 = vector.shape_cast %38 : vector<1x1x128xf32> to vector<128xf32>
    %40 = vector.shape_cast %39 : vector<128xf32> to vector<1x1x128xf32>
    %41 = vector.broadcast %40 : vector<1x1x128xf32> to vector<8x16x128xf32>
    %42 = arith.mulf %37, %41 : vector<8x16x128xf32>
    %43 = arith.addf %33, %42 : vector<8x16x128xf32>
    %44 = vector.extract_strided_slice %29 {offsets = [0, 1, 0], sizes = [1, 1, 128], strides = [1, 1, 1]} : vector<3x3x128xf32> to vector<1x1x128xf32>
    %45 = vector.shape_cast %44 : vector<1x1x128xf32> to vector<128xf32>
    %46 = vector.shape_cast %45 : vector<128xf32> to vector<1x1x128xf32>
    %47 = vector.broadcast %46 : vector<1x1x128xf32> to vector<8x16x128xf32>
    %48 = arith.mulf %34, %47 : vector<8x16x128xf32>
    %49 = arith.addf %43, %48 : vector<8x16x128xf32>
    %cst_29 = arith.constant 0.000000e+00 : f32
    %50 = vector.broadcast %cst_29 : f32 to vector<8x1x128xf32>
    %51 = vector.extract_strided_slice %34 {offsets = [0, 1, 0], sizes = [8, 15, 128], strides = [1, 1, 1]} : vector<8x16x128xf32> to vector<8x15x128xf32>
    %52 = tpu.concatenate %51, %50 in 1 : vector<8x15x128xf32>, vector<8x1x128xf32> -> vector<8x16x128xf32>
    %53 = vector.extract_strided_slice %29 {offsets = [0, 2, 0], sizes = [1, 1, 128], strides = [1, 1, 1]} : vector<3x3x128xf32> to vector<1x1x128xf32>
    %54 = vector.shape_cast %53 : vector<1x1x128xf32> to vector<128xf32>
    %55 = vector.shape_cast %54 : vector<128xf32> to vector<1x1x128xf32>
    %56 = vector.broadcast %55 : vector<1x1x128xf32> to vector<8x16x128xf32>
    %57 = arith.mulf %52, %56 : vector<8x16x128xf32>
    %58 = arith.addf %49, %57 : vector<8x16x128xf32>
    %c1 = arith.constant 1 : index
    %c0_30 = arith.constant 0 : index
    %c0_31 = arith.constant 0 : index
    %59 = vector.load %arg10[%c1, %c0_30, %c0_31] : memref<10x16x128xf32, #tpu.memory_space<vmem>>, vector<8x16x128xf32>
    %cst_32 = arith.constant 0.000000e+00 : f32
    %60 = vector.broadcast %cst_32 : f32 to vector<8x1x128xf32>
    %61 = vector.extract_strided_slice %59 {offsets = [0, 0, 0], sizes = [8, 15, 128], strides = [1, 1, 1]} : vector<8x16x128xf32> to vector<8x15x128xf32>
    %62 = tpu.concatenate %60, %61 in 1 : vector<8x1x128xf32>, vector<8x15x128xf32> -> vector<8x16x128xf32>
    %63 = vector.extract_strided_slice %29 {offsets = [1, 0, 0], sizes = [1, 1, 128], strides = [1, 1, 1]} : vector<3x3x128xf32> to vector<1x1x128xf32>
    %64 = vector.shape_cast %63 : vector<1x1x128xf32> to vector<128xf32>
    %65 = vector.shape_cast %64 : vector<128xf32> to vector<1x1x128xf32>
    %66 = vector.broadcast %65 : vector<1x1x128xf32> to vector<8x16x128xf32>
    %67 = arith.mulf %62, %66 : vector<8x16x128xf32>
    %68 = arith.addf %58, %67 : vector<8x16x128xf32>
    %69 = vector.extract_strided_slice %29 {offsets = [1, 1, 0], sizes = [1, 1, 128], strides = [1, 1, 1]} : vector<3x3x128xf32> to vector<1x1x128xf32>
    %70 = vector.shape_cast %69 : vector<1x1x128xf32> to vector<128xf32>
    %71 = vector.shape_cast %70 : vector<128xf32> to vector<1x1x128xf32>
    %72 = vector.broadcast %71 : vector<1x1x128xf32> to vector<8x16x128xf32>
    %73 = arith.mulf %59, %72 : vector<8x16x128xf32>
    %74 = arith.addf %68, %73 : vector<8x16x128xf32>
    %cst_33 = arith.constant 0.000000e+00 : f32
    %75 = vector.broadcast %cst_33 : f32 to vector<8x1x128xf32>
    %76 = vector.extract_strided_slice %59 {offsets = [0, 1, 0], sizes = [8, 15, 128], strides = [1, 1, 1]} : vector<8x16x128xf32> to vector<8x15x128xf32>
    %77 = tpu.concatenate %76, %75 in 1 : vector<8x15x128xf32>, vector<8x1x128xf32> -> vector<8x16x128xf32>
    %78 = vector.extract_strided_slice %29 {offsets = [1, 2, 0], sizes = [1, 1, 128], strides = [1, 1, 1]} : vector<3x3x128xf32> to vector<1x1x128xf32>
    %79 = vector.shape_cast %78 : vector<1x1x128xf32> to vector<128xf32>
    %80 = vector.shape_cast %79 : vector<128xf32> to vector<1x1x128xf32>
    %81 = vector.broadcast %80 : vector<1x1x128xf32> to vector<8x16x128xf32>
    %82 = arith.mulf %77, %81 : vector<8x16x128xf32>
    %83 = arith.addf %74, %82 : vector<8x16x128xf32>
    %c2 = arith.constant 2 : index
    %c0_34 = arith.constant 0 : index
    %c0_35 = arith.constant 0 : index
    %84 = vector.load %arg10[%c2, %c0_34, %c0_35] : memref<10x16x128xf32, #tpu.memory_space<vmem>>, vector<8x16x128xf32>
    %cst_36 = arith.constant 0.000000e+00 : f32
    %85 = vector.broadcast %cst_36 : f32 to vector<8x1x128xf32>
    %86 = vector.extract_strided_slice %84 {offsets = [0, 0, 0], sizes = [8, 15, 128], strides = [1, 1, 1]} : vector<8x16x128xf32> to vector<8x15x128xf32>
    %87 = tpu.concatenate %85, %86 in 1 : vector<8x1x128xf32>, vector<8x15x128xf32> -> vector<8x16x128xf32>
    %88 = vector.extract_strided_slice %29 {offsets = [2, 0, 0], sizes = [1, 1, 128], strides = [1, 1, 1]} : vector<3x3x128xf32> to vector<1x1x128xf32>
    %89 = vector.shape_cast %88 : vector<1x1x128xf32> to vector<128xf32>
    %90 = vector.shape_cast %89 : vector<128xf32> to vector<1x1x128xf32>
    %91 = vector.broadcast %90 : vector<1x1x128xf32> to vector<8x16x128xf32>
    %92 = arith.mulf %87, %91 : vector<8x16x128xf32>
    %93 = arith.addf %83, %92 : vector<8x16x128xf32>
    %94 = vector.extract_strided_slice %29 {offsets = [2, 1, 0], sizes = [1, 1, 128], strides = [1, 1, 1]} : vector<3x3x128xf32> to vector<1x1x128xf32>
    %95 = vector.shape_cast %94 : vector<1x1x128xf32> to vector<128xf32>
    %96 = vector.shape_cast %95 : vector<128xf32> to vector<1x1x128xf32>
    %97 = vector.broadcast %96 : vector<1x1x128xf32> to vector<8x16x128xf32>
    %98 = arith.mulf %84, %97 : vector<8x16x128xf32>
    %99 = arith.addf %93, %98 : vector<8x16x128xf32>
    %cst_37 = arith.constant 0.000000e+00 : f32
    %100 = vector.broadcast %cst_37 : f32 to vector<8x1x128xf32>
    %101 = vector.extract_strided_slice %84 {offsets = [0, 1, 0], sizes = [8, 15, 128], strides = [1, 1, 1]} : vector<8x16x128xf32> to vector<8x15x128xf32>
    %102 = tpu.concatenate %101, %100 in 1 : vector<8x15x128xf32>, vector<8x1x128xf32> -> vector<8x16x128xf32>
    %103 = vector.extract_strided_slice %29 {offsets = [2, 2, 0], sizes = [1, 1, 128], strides = [1, 1, 1]} : vector<3x3x128xf32> to vector<1x1x128xf32>
    %104 = vector.shape_cast %103 : vector<1x1x128xf32> to vector<128xf32>
    %105 = vector.shape_cast %104 : vector<128xf32> to vector<1x1x128xf32>
    %106 = vector.broadcast %105 : vector<1x1x128xf32> to vector<8x16x128xf32>
    %107 = arith.mulf %102, %106 : vector<8x16x128xf32>
    %108 = arith.addf %99, %107 : vector<8x16x128xf32>
    %109 = tpu.iota {dimensions = array<i32: 0>} : vector<8x16x128xi32>
    %c2_i32 = arith.constant 2 : i32
    %110 = arith.subi %0, %c2_i32 : i32
    %111 = vector.broadcast %110 : i32 to vector<8x16x128xi32>
    %112 = arith.addi %109, %111 : vector<8x16x128xi32>
    %c0_i32_38 = arith.constant 0 : i32
    %113 = vector.broadcast %c0_i32_38 : i32 to vector<8x16x128xi32>
    %114 = arith.cmpi sge, %112, %113 : vector<8x16x128xi32>
    %c16_i32 = arith.constant 16 : i32
    %115 = vector.broadcast %c16_i32 : i32 to vector<8x16x128xi32>
    %116 = arith.cmpi slt, %112, %115 : vector<8x16x128xi32>
    %117 = arith.andi %114, %116 : vector<8x16x128xi1>
    %cst_39 = arith.constant 0.000000e+00 : f32
    %118 = vector.broadcast %cst_39 : f32 to vector<8x16x128xf32>
    %119 = arith.select %117, %108, %118 : vector<8x16x128xi1>, vector<8x16x128xf32>
    %cst_40 = arith.constant 0.000000e+00 : f32
    %120 = vector.broadcast %cst_40 : f32 to vector<8x2x128xf32>
    %c0_41 = arith.constant 0 : index
    %c0_42 = arith.constant 0 : index
    %c0_43 = arith.constant 0 : index
    %121 = vector.load %arg11[%c0_41, %c0_42, %c0_43] : memref<8x20x128xf32, #tpu.memory_space<vmem>>, vector<8x2x128xf32>
    tpu.vector_store %arg11[%c0_41, %c0_42, %c0_43], %120 {strides = array<i32>} : memref<8x20x128xf32, #tpu.memory_space<vmem>>, vector<8x2x128xf32>,
    %cst_44 = arith.constant 0.000000e+00 : f32
    %122 = vector.broadcast %cst_44 : f32 to vector<8x2x128xf32>
    %c0_45 = arith.constant 0 : index
    %c18 = arith.constant 18 : index
    %c0_46 = arith.constant 0 : index
    %123 = vector.load %arg11[%c0_45, %c18, %c0_46] : memref<8x20x128xf32, #tpu.memory_space<vmem>>, vector<8x2x128xf32>
    tpu.vector_store %arg11[%c0_45, %c18, %c0_46], %122 {strides = array<i32>} : memref<8x20x128xf32, #tpu.memory_space<vmem>>, vector<8x2x128xf32>,
    %c0_47 = arith.constant 0 : index
    %c2_48 = arith.constant 2 : index
    %c0_49 = arith.constant 0 : index
    %124 = vector.load %arg11[%c0_47, %c2_48, %c0_49] : memref<8x20x128xf32, #tpu.memory_space<vmem>>, vector<8x16x128xf32>
    tpu.vector_store %arg11[%c0_47, %c2_48, %c0_49], %119 {strides = array<i32>} : memref<8x20x128xf32, #tpu.memory_space<vmem>>, vector<8x16x128xf32>,
    %c0_50 = arith.constant 0 : index
    %c0_51 = arith.constant 0 : index
    %125 = vector.load %arg6[%c0_50, %c0_51] : memref<1x128xf32, #tpu.memory_space<vmem>>, vector<1x128xf32>
    %126 = vector.shape_cast %125 : vector<1x128xf32> to vector<128xf32>
    %127 = vector.shape_cast %126 : vector<128xf32> to vector<1x1x128xf32>
    %128 = vector.broadcast %127 : vector<1x1x128xf32> to vector<4x16x128xf32>
    %c0_i32_52 = arith.constant 0 : i32
    %129 = arith.index_cast %c0_i32_52 : i32 to index
    %c0_53 = arith.constant 0 : index
    %c0_54 = arith.constant 0 : index
    %130 = vector.load %arg5[%129, %c0_53, %c0_54] : memref<3x3x128xf32, #tpu.memory_space<vmem>>, vector<1x3x128xf32>
    %131 = vector.shape_cast %130 : vector<1x3x128xf32> to vector<3x128xf32>
    %c2_i32_55 = arith.constant 2 : i32
    %132 = arith.muli %c0_i32_52, %c2_i32_55 : i32
    %133 = arith.index_cast %132 : i32 to index
    %c0_56 = arith.constant 0 : index
    %c0_57 = arith.constant 0 : index
    %134 = vector.load %arg11[%133, %c0_56, %c0_57] : memref<8x20x128xf32, #tpu.memory_space<vmem>>, vector<4x16x128xf32>
    %135 = vector.extract_strided_slice %131 {offsets = [0, 0], sizes = [1, 128], strides = [1, 1]} : vector<3x128xf32> to vector<1x128xf32>
    %136 = vector.shape_cast %135 : vector<1x128xf32> to vector<128xf32>
    %137 = vector.shape_cast %136 : vector<128xf32> to vector<1x1x128xf32>
    %138 = vector.broadcast %137 : vector<1x1x128xf32> to vector<4x16x128xf32>
    %139 = arith.mulf %134, %138 : vector<4x16x128xf32>
    %140 = arith.addf %128, %139 : vector<4x16x128xf32>
    %141 = arith.index_cast %132 : i32 to index
    %c2_58 = arith.constant 2 : index
    %c0_59 = arith.constant 0 : index
    %142 = vector.load %arg11[%141, %c2_58, %c0_59] : memref<8x20x128xf32, #tpu.memory_space<vmem>>, vector<4x16x128xf32>
    %143 = vector.extract_strided_slice %131 {offsets = [1, 0], sizes = [1, 128], strides = [1, 1]} : vector<3x128xf32> to vector<1x128xf32>
    %144 = vector.shape_cast %143 : vector<1x128xf32> to vector<128xf32>
    %145 = vector.shape_cast %144 : vector<128xf32> to vector<1x1x128xf32>
    %146 = vector.broadcast %145 : vector<1x1x128xf32> to vector<4x16x128xf32>
    %147 = arith.mulf %142, %146 : vector<4x16x128xf32>
    %148 = arith.addf %140, %147 : vector<4x16x128xf32>
    %149 = arith.index_cast %132 : i32 to index
    %c4 = arith.constant 4 : index
    %c0_60 = arith.constant 0 : index
    %150 = vector.load %arg11[%149, %c4, %c0_60] : memref<8x20x128xf32, #tpu.memory_space<vmem>>, vector<4x16x128xf32>
    %151 = vector.extract_strided_slice %131 {offsets = [2, 0], sizes = [1, 128], strides = [1, 1]} : vector<3x128xf32> to vector<1x128xf32>
    %152 = vector.shape_cast %151 : vector<1x128xf32> to vector<128xf32>
    %153 = vector.shape_cast %152 : vector<128xf32> to vector<1x1x128xf32>
    %154 = vector.broadcast %153 : vector<1x1x128xf32> to vector<4x16x128xf32>
    %155 = arith.mulf %150, %154 : vector<4x16x128xf32>
    %156 = arith.addf %148, %155 : vector<4x16x128xf32>
    %c1_i32 = arith.constant 1 : i32
    %157 = arith.index_cast %c1_i32 : i32 to index
    %c0_61 = arith.constant 0 : index
    %c0_62 = arith.constant 0 : index
    %158 = vector.load %arg5[%157, %c0_61, %c0_62] : memref<3x3x128xf32, #tpu.memory_space<vmem>>, vector<1x3x128xf32>
    %159 = vector.shape_cast %158 : vector<1x3x128xf32> to vector<3x128xf32>
    %c2_i32_63 = arith.constant 2 : i32
    %160 = arith.muli %c1_i32, %c2_i32_63 : i32
    %161 = arith.index_cast %160 : i32 to index
    %c0_64 = arith.constant 0 : index
    %c0_65 = arith.constant 0 : index
    %162 = vector.load %arg11[%161, %c0_64, %c0_65] : memref<8x20x128xf32, #tpu.memory_space<vmem>>, vector<4x16x128xf32>
    %163 = vector.extract_strided_slice %159 {offsets = [0, 0], sizes = [1, 128], strides = [1, 1]} : vector<3x128xf32> to vector<1x128xf32>
    %164 = vector.shape_cast %163 : vector<1x128xf32> to vector<128xf32>
    %165 = vector.shape_cast %164 : vector<128xf32> to vector<1x1x128xf32>
    %166 = vector.broadcast %165 : vector<1x1x128xf32> to vector<4x16x128xf32>
    %167 = arith.mulf %162, %166 : vector<4x16x128xf32>
    %168 = arith.addf %156, %167 : vector<4x16x128xf32>
    %169 = arith.index_cast %160 : i32 to index
    %c2_66 = arith.constant 2 : index
    %c0_67 = arith.constant 0 : index
    %170 = vector.load %arg11[%169, %c2_66, %c0_67] : memref<8x20x128xf32, #tpu.memory_space<vmem>>, vector<4x16x128xf32>
    %171 = vector.extract_strided_slice %159 {offsets = [1, 0], sizes = [1, 128], strides = [1, 1]} : vector<3x128xf32> to vector<1x128xf32>
    %172 = vector.shape_cast %171 : vector<1x128xf32> to vector<128xf32>
    %173 = vector.shape_cast %172 : vector<128xf32> to vector<1x1x128xf32>
    %174 = vector.broadcast %173 : vector<1x1x128xf32> to vector<4x16x128xf32>
    %175 = arith.mulf %170, %174 : vector<4x16x128xf32>
    %176 = arith.addf %168, %175 : vector<4x16x128xf32>
    %177 = arith.index_cast %160 : i32 to index
    %c4_68 = arith.constant 4 : index
    %c0_69 = arith.constant 0 : index
    %178 = vector.load %arg11[%177, %c4_68, %c0_69] : memref<8x20x128xf32, #tpu.memory_space<vmem>>, vector<4x16x128xf32>
    %179 = vector.extract_strided_slice %159 {offsets = [2, 0], sizes = [1, 128], strides = [1, 1]} : vector<3x128xf32> to vector<1x128xf32>
    %180 = vector.shape_cast %179 : vector<1x128xf32> to vector<128xf32>
    %181 = vector.shape_cast %180 : vector<128xf32> to vector<1x1x128xf32>
    %182 = vector.broadcast %181 : vector<1x1x128xf32> to vector<4x16x128xf32>
    %183 = arith.mulf %178, %182 : vector<4x16x128xf32>
    %184 = arith.addf %176, %183 : vector<4x16x128xf32>
    %c2_i32_70 = arith.constant 2 : i32
    %185 = arith.index_cast %c2_i32_70 : i32 to index
    %c0_71 = arith.constant 0 : index
    %c0_72 = arith.constant 0 : index
    %186 = vector.load %arg5[%185, %c0_71, %c0_72] : memref<3x3x128xf32, #tpu.memory_space<vmem>>, vector<1x3x128xf32>
    %187 = vector.shape_cast %186 : vector<1x3x128xf32> to vector<3x128xf32>
    %c2_i32_73 = arith.constant 2 : i32
    %188 = arith.muli %c2_i32_70, %c2_i32_73 : i32
    %189 = arith.index_cast %188 : i32 to index
    %c0_74 = arith.constant 0 : index
    %c0_75 = arith.constant 0 : index
    %190 = vector.load %arg11[%189, %c0_74, %c0_75] : memref<8x20x128xf32, #tpu.memory_space<vmem>>, vector<4x16x128xf32>
    %191 = vector.extract_strided_slice %187 {offsets = [0, 0], sizes = [1, 128], strides = [1, 1]} : vector<3x128xf32> to vector<1x128xf32>
    %192 = vector.shape_cast %191 : vector<1x128xf32> to vector<128xf32>
    %193 = vector.shape_cast %192 : vector<128xf32> to vector<1x1x128xf32>
    %194 = vector.broadcast %193 : vector<1x1x128xf32> to vector<4x16x128xf32>
    %195 = arith.mulf %190, %194 : vector<4x16x128xf32>
    %196 = arith.addf %184, %195 : vector<4x16x128xf32>
    %197 = arith.index_cast %188 : i32 to index
    %c2_76 = arith.constant 2 : index
    %c0_77 = arith.constant 0 : index
    %198 = vector.load %arg11[%197, %c2_76, %c0_77] : memref<8x20x128xf32, #tpu.memory_space<vmem>>, vector<4x16x128xf32>
    %199 = vector.extract_strided_slice %187 {offsets = [1, 0], sizes = [1, 128], strides = [1, 1]} : vector<3x128xf32> to vector<1x128xf32>
    %200 = vector.shape_cast %199 : vector<1x128xf32> to vector<128xf32>
    %201 = vector.shape_cast %200 : vector<128xf32> to vector<1x1x128xf32>
    %202 = vector.broadcast %201 : vector<1x1x128xf32> to vector<4x16x128xf32>
    %203 = arith.mulf %198, %202 : vector<4x16x128xf32>
    %204 = arith.addf %196, %203 : vector<4x16x128xf32>
    %205 = arith.index_cast %188 : i32 to index
    %c4_78 = arith.constant 4 : index
    %c0_79 = arith.constant 0 : index
    %206 = vector.load %arg11[%205, %c4_78, %c0_79] : memref<8x20x128xf32, #tpu.memory_space<vmem>>, vector<4x16x128xf32>
    %207 = vector.extract_strided_slice %187 {offsets = [2, 0], sizes = [1, 128], strides = [1, 1]} : vector<3x128xf32> to vector<1x128xf32>
    %208 = vector.shape_cast %207 : vector<1x128xf32> to vector<128xf32>
    %209 = vector.shape_cast %208 : vector<128xf32> to vector<1x1x128xf32>
    %210 = vector.broadcast %209 : vector<1x1x128xf32> to vector<4x16x128xf32>
    %211 = arith.mulf %206, %210 : vector<4x16x128xf32>
    %212 = arith.addf %204, %211 : vector<4x16x128xf32>
    %c3_i32_80 = arith.constant 3 : i32
    %c3 = arith.constant 3 : index
    %c0_81 = arith.constant 0 : index
    %c0_82 = arith.constant 0 : index
    %213 = vector.load %arg10[%c3, %c0_81, %c0_82] : memref<10x16x128xf32, #tpu.memory_space<vmem>>, vector<4x16x128xf32>
    %214 = vector.shape_cast %212 : vector<4x16x128xf32> to vector<64x128xf32>
    %215 = arith.truncf %214 : vector<64x128xf32> to vector<64x128xbf16>
    %c0_83 = arith.constant 0 : index
    %c0_84 = arith.constant 0 : index
    %216 = vector.load %arg7[%c0_83, %c0_84] : memref<128x128xbf16, #tpu.memory_space<vmem>>, vector<128x128xbf16>
    %cst_85 = arith.constant dense<0.000000e+00> : vector<64x128xf32>
    %217 = tpu.matmul %215, %216, %cst_85 {dimension_numbers = #tpu.dot_dimension_numbers<[1], [0], [0], [1], [0, 0, 1, 1], [], []>} : vector<64x128xbf16>, vector<128x128xbf16>, vector<64x128xf32> -> vector<64x128xf32>
    %c0_86 = arith.constant 0 : index
    %c0_87 = arith.constant 0 : index
    %218 = vector.load %arg8[%c0_86, %c0_87] : memref<1x128xf32, #tpu.memory_space<vmem>>, vector<1x128xf32>
    %219 = vector.shape_cast %218 : vector<1x128xf32> to vector<128xf32>
    %220 = vector.shape_cast %219 : vector<128xf32> to vector<1x128xf32>
    %221 = vector.broadcast %220 : vector<1x128xf32> to vector<64x128xf32>
    %222 = arith.addf %217, %221 : vector<64x128xf32>
    %223 = vector.shape_cast %213 : vector<4x16x128xf32> to vector<64x128xf32>
    %224 = arith.mulf %223, %222 : vector<64x128xf32>
    %225 = vector.shape_cast %224 : vector<64x128xf32> to vector<4x16x128xf32>
    %c0_88 = arith.constant 0 : index
    %c0_89 = arith.constant 0 : index
    %c0_90 = arith.constant 0 : index
    %c0_91 = arith.constant 0 : index
    %226 = vector.load %arg9[%c0_88, %c0_89, %c0_90, %c0_91] : memref<1x4x16x128xf32, #tpu.memory_space<vmem>>, vector<1x4x16x128xf32>
    %227 = vector.shape_cast %226 : vector<1x4x16x128xf32> to vector<4x16x128xf32>
    %228 = vector.shape_cast %225 : vector<4x16x128xf32> to vector<1x4x16x128xf32>
    tpu.vector_store %arg9[%c0_88, %c0_89, %c0_90, %c0_91], %228 {strides = array<i32>} : memref<1x4x16x128xf32, #tpu.memory_space<vmem>>, vector<1x4x16x128xf32>,
    return
  }
  func.func @transform_1(%arg0: i32, %arg1: i32) -> (i32, i32, i32) {
    %c0_i32 = arith.constant 0 : i32
    %c0_i32_0 = arith.constant 0 : i32
    %c0_i32_1 = arith.constant 0 : i32
    %c0_i32_2 = arith.constant 0 : i32
    return %c0_i32, %c0_i32_0, %c0_i32_1 : i32, i32, i32
  }
  func.func @transform_2(%arg0: i32, %arg1: i32) -> (i32, i32) {
    %c0_i32 = arith.constant 0 : i32
    %c0_i32_0 = arith.constant 0 : i32
    %c0_i32_1 = arith.constant 0 : i32
    return %c0_i32, %c0_i32_0 : i32, i32
  }
  func.func @transform_3(%arg0: i32, %arg1: i32) -> (i32, i32, i32) {
    %c0_i32 = arith.constant 0 : i32
    %c0_i32_0 = arith.constant 0 : i32
    %c0_i32_1 = arith.constant 0 : i32
    %c0_i32_2 = arith.constant 0 : i32
    return %c0_i32, %c0_i32_0, %c0_i32_1 : i32, i32, i32
  }
  func.func @transform_4(%arg0: i32, %arg1: i32) -> (i32, i32) {
    %c0_i32 = arith.constant 0 : i32
    %c0_i32_0 = arith.constant 0 : i32
    %c0_i32_1 = arith.constant 0 : i32
    return %c0_i32, %c0_i32_0 : i32, i32
  }
  func.func @transform_5(%arg0: i32, %arg1: i32) -> (i32, i32) {
    %c0_i32 = arith.constant 0 : i32
    %c0_i32_0 = arith.constant 0 : i32
    %c0_i32_1 = arith.constant 0 : i32
    return %c0_i32, %c0_i32_0 : i32, i32
  }
  func.func @transform_6(%arg0: i32, %arg1: i32) -> (i32, i32) {
    %c0_i32 = arith.constant 0 : i32
    %c0_i32_0 = arith.constant 0 : i32
    %c0_i32_1 = arith.constant 0 : i32
    return %c0_i32, %c0_i32_0 : i32, i32
  }
  func.func @transform_7(%arg0: i32, %arg1: i32) -> (i32, i32, i32, i32) {
    %c0_i32 = arith.constant 0 : i32
    %c0_i32_0 = arith.constant 0 : i32
    %c0_i32_1 = arith.constant 0 : i32
    return %arg0, %arg1, %c0_i32, %c0_i32_0 : i32, i32, i32, i32
  }
}

</mosaic_0001>

<llo_original>
// kernel: lka_forward_nhwc.1
$region0: #{lka_forward_nhwc.1}
  #allocation0 [shape = 'u32[]', space=smem, size = 0x4, offset = 0x4, fixed_abs, tag = 'smem constant byte address 0x4 - core index']
  #allocation1 [shape = 'u32[144,128]{1,0:T(1,128)}', space=vmem, size = 0x12000, scoped, tag = 'internal scratch']
  #allocation2 [shape = 'f32[10,16,128]{2,1,0:T(8,128)}', space=vmem, size = 0x14000, scoped, tag = 'scratch operand']
  #allocation3 [shape = 'f32[8,20,128]{2,1,0:T(8,128)}', space=vmem, size = 0x18000, scoped, tag = 'scratch operand']
  #allocation4 [shape = 's32[3]{0}', space=sflag, size = 0xc, scoped, tag = 'scratch operand']
  #allocation7 [shape = 's32[]', space=sflag, size = 0x4, offset = 0, fixed_abs, tag = 'sflag constant byte address 0x0 - dummy sync flag']
  #allocation8 [shape = 's32[]', space=sflag, size = 0x4, offset = 0, fixed_abs, tag = 'sflag constant byte address 0x0 - dummy sync flag']
  #allocation9 [shape = 'u32[]', space=smem, size = 0x4, offset = 0x44, fixed_abs, tag = 'smem constant byte address 0x44 - assertion arg 0']
  #allocation10 [shape = 'u32[]', space=smem, size = 0x4, offset = 0x48, fixed_abs, tag = 'smem constant byte address 0x48 - assertion arg 1']
  #allocation11 [shape = 's32[]', space=sflag, size = 0x4, offset = 0, fixed_abs, tag = 'sflag constant byte address 0x0 - dummy sync flag']
  #allocation12 [shape = 's32[]', space=sflag, size = 0x4, offset = 0, fixed_abs, tag = 'sflag constant byte address 0x0 - dummy sync flag']
  #allocation13 [shape = 's32[]', space=sflag, size = 0x4, offset = 0, fixed_abs, tag = 'sflag constant byte address 0x0 - dummy sync flag']
  #allocation14 [shape = 's32[]', space=sflag, size = 0x4, offset = 0, fixed_abs, tag = 'sflag constant byte address 0x0 - dummy sync flag']
  %s0 = inlined_call_operand.hbm [shape: f32[2,16,16,128], index: 0, kind: input, shape index: {}]
  %s1 = inlined_call_operand.vmem [shape: f32[3,3,128], index: 1, kind: input, shape index: {}]
  %s2 = inlined_call_operand.vmem [shape: f32[1,128], index: 2, kind: input, shape index: {}]
  %s3 = inlined_call_operand.vmem [shape: f32[3,3,128], index: 3, kind: input, shape index: {}]
  %s4 = inlined_call_operand.vmem [shape: f32[1,128], index: 4, kind: input, shape index: {}]
  %s5 = inlined_call_operand.vmem [shape: bf16[128,128], index: 5, kind: input, shape index: {}]
  %s6 = inlined_call_operand.vmem [shape: f32[1,128], index: 6, kind: input, shape index: {}]
  %s7 = inlined_call_operand.hbm [shape: f32[2,16,16,128], index: 7, kind: output, shape index: {}]
  %s8 = sld [smem:[#allocation0]]
  $region93: #{lka_forward_nhwc.1} parent=0
    _
  %s10 = ssub.s32 1, %s8
  %s11 = scalar_select 0, %s10, %s8
  $region1: #{lka_forward_nhwc.1} parent=0
    #allocation5 [shape = 'u8[65536]{0}', space=vmem, size = 0x10000, scoped, tag = 'output window, operand 0']
    #allocation6 [shape = 's32[2]{0}', space=sflag, size = 0x8, scoped, tag = 'scoped memory for lka_forward_nhwc.1']
    %12 = vsyncpa [#allocation6], 0
    %s13 = scalar_lea.sflag [#allocation6], 1
    %14 = vsyncpa %s13, 0
    loop: start=0, step=1, limit=10
    $region2: #{lka_forward_nhwc.1} parent=1 // loop_pre_header
      _
    $region3: #{lka_forward_nhwc.1} parent=1 // loop_header
      %s16 = sphi 0, %s20
      %p17 = scmp.ge.s32.totalorder %s16, 10
      %s23 = sphi 0, %s35
      %s24 = sphi 0, %s31
      %s25 = sphi 0, %s23
      %s26 = sphi 0, %s24
      %s27 = sphi 0, %s25
      %s28 = sphi 0, %s26
      %s36 = sphi 0, %s36
      %s38 = sphi 0, %s36
      %s39 = sphi 0, %s38
      %s53 = sphi 0, %s39
      %s57 = sphi 0, %s57
      %s59 = sphi 0, %s57
      %s60 = sphi 0, %s59
      %s74 = sphi 0, %s60
      %s78 = sphi 0, %s78
      %s80 = sphi 0, %s78
      %s81 = sphi 0, %s80
      %s95 = sphi 0, %s81
      %s99 = sphi 0, %s99
      %s101 = sphi 0, %s99
      %s102 = sphi 0, %s101
      %s116 = sphi 0, %s102
      %s120 = sphi 0, %s120
      %s122 = sphi 0, %s120
      %s123 = sphi 0, %s122
      %s137 = sphi 0, %s123
      %s141 = sphi 0, %s141
      %s143 = sphi 0, %s141
      %s144 = sphi 0, %s143
      %s158 = sphi 0, %s144
      %s166 = sphi 0, %s168
      %s169 = sphi 0, %s166
      %s170 = sphi 0, %s169
      %s186 = sphi 0, %s170
    $region4: #{lka_forward_nhwc.1} parent=1 // loop_header_branch
      %19 = sbr.rel (%p17) target = $region8
    $region5: #{lka_forward_nhwc.1} parent=1 // loop_body
      %s21 = ssub.s32 %s16, 1
      %s22 = ssub.s32 %s16, 2
      %s29 = sadd.s32 1, %s24
      %p30 = scmp.ge.s32.totalorder %s29, 4
      %s31 = scalar_select %p30, 0, %s29
      %s32 = sadd.s32 1, %s23
      %s33 = scalar_select %p30, %s32, %s23
      %p34 = scmp.ge.s32.totalorder %s33, 2
      %s35 = scalar_select %p34, 0, %s33
      %s37 = sadd.s32 %s36, 1
      %p40 = scmp.eq.s32.totalorder %s16, 7
      %p41 = scmp.ne.s32.totalorder %s36, %s38
      %p42 = scmp.eq.s32.totalorder %s16, 0
      %p43 = por %p41, %p42
      %p44 = scmp.ne.s32.totalorder %s36, %s38
      %p45 = scmp.eq.s32.totalorder %s21, 7
      %p46 = por %p44, %p45
      %p47 = scmp.ne.s32.totalorder %s38, %s39
      %p48 = scmp.eq.s32.totalorder %s21, 0
      %p49 = por %p47, %p48
      %p50 = scmp.ne.s32.totalorder %s38, %s39
      %p51 = scmp.eq.s32.totalorder %s22, 7
      %p52 = por %p50, %p51
      %p54 = scmp.ne.s32.totalorder %s39, %s53
      %p55 = scmp.eq.s32.totalorder %s22, 0
      %p56 = por %p54, %p55
      %s58 = sadd.s32 %s57, 1
      %p61 = scmp.eq.s32.totalorder %s16, 7
      %p62 = scmp.ne.s32.totalorder %s57, %s59
      %p63 = scmp.eq.s32.totalorder %s16, 0
      %p64 = por %p62, %p63
      %p65 = scmp.ne.s32.totalorder %s57, %s59
      %p66 = scmp.eq.s32.totalorder %s21, 7
      %p67 = por %p65, %p66
      %p68 = scmp.ne.s32.totalorder %s59, %s60
      %p69 = scmp.eq.s32.totalorder %s21, 0
      %p70 = por %p68, %p69
      %p71 = scmp.ne.s32.totalorder %s59, %s60
      %p72 = scmp.eq.s32.totalorder %s22, 7
      %p73 = por %p71, %p72
      %p75 = scmp.ne.s32.totalorder %s60, %s74
      %p76 = scmp.eq.s32.totalorder %s22, 0
      %p77 = por %p75, %p76
      %s79 = sadd.s32 %s78, 1
      %p82 = scmp.eq.s32.totalorder %s16, 7
      %p83 = scmp.ne.s32.totalorder %s78, %s80
      %p84 = scmp.eq.s32.totalorder %s16, 0
      %p85 = por %p83, %p84
      %p86 = scmp.ne.s32.totalorder %s78, %s80
      %p87 = scmp.eq.s32.totalorder %s21, 7
      %p88 = por %p86, %p87
      %p89 = scmp.ne.s32.totalorder %s80, %s81
      %p90 = scmp.eq.s32.totalorder %s21, 0
      %p91 = por %p89, %p90
      %p92 = scmp.ne.s32.totalorder %s80, %s81
      %p93 = scmp.eq.s32.totalorder %s22, 7
      %p94 = por %p92, %p93
      %p96 = scmp.ne.s32.totalorder %s81, %s95
      %p97 = scmp.eq.s32.totalorder %s22, 0
      %p98 = por %p96, %p97
      %s100 = sadd.s32 %s99, 1
      %p103 = scmp.eq.s32.totalorder %s16, 7
      %p104 = scmp.ne.s32.totalorder %s99, %s101
      %p105 = scmp.eq.s32.totalorder %s16, 0
      %p106 = por %p104, %p105
      %p107 = scmp.ne.s32.totalorder %s99, %s101
      %p108 = scmp.eq.s32.totalorder %s21, 7
      %p109 = por %p107, %p108
      %p110 = scmp.ne.s32.totalorder %s101, %s102
      %p111 = scmp.eq.s32.totalorder %s21, 0
      %p112 = por %p110, %p111
      %p113 = scmp.ne.s32.totalorder %s101, %s102
      %p114 = scmp.eq.s32.totalorder %s22, 7
      %p115 = por %p113, %p114
      %p117 = scmp.ne.s32.totalorder %s102, %s116
      %p118 = scmp.eq.s32.totalorder %s22, 0
      %p119 = por %p117, %p118
      %s121 = sadd.s32 %s120, 1
      %p124 = scmp.eq.s32.totalorder %s16, 7
      %p125 = scmp.ne.s32.totalorder %s120, %s122
      %p126 = scmp.eq.s32.totalorder %s16, 0
      %p127 = por %p125, %p126
      %p128 = scmp.ne.s32.totalorder %s120, %s122
      %p129 = scmp.eq.s32.totalorder %s21, 7
      %p130 = por %p128, %p129
      %p131 = scmp.ne.s32.totalorder %s122, %s123
      %p132 = scmp.eq.s32.totalorder %s21, 0
      %p133 = por %p131, %p132
      %p134 = scmp.ne.s32.totalorder %s122, %s123
      %p135 = scmp.eq.s32.totalorder %s22, 7
      %p136 = por %p134, %p135
      %p138 = scmp.ne.s32.totalorder %s123, %s137
      %p139 = scmp.eq.s32.totalorder %s22, 0
      %p140 = por %p138, %p139
      %s142 = sadd.s32 %s141, 1
      %p145 = scmp.eq.s32.totalorder %s16, 7
      %p146 = scmp.ne.s32.totalorder %s141, %s143
      %p147 = scmp.eq.s32.totalorder %s16, 0
      %p148 = por %p146, %p147
      %p149 = scmp.ne.s32.totalorder %s141, %s143
      %p150 = scmp.eq.s32.totalorder %s21, 7
      %p151 = por %p149, %p150
      %p152 = scmp.ne.s32.totalorder %s143, %s144
      %p153 = scmp.eq.s32.totalorder %s21, 0
      %p154 = por %p152, %p153
      %p155 = scmp.ne.s32.totalorder %s143, %s144
      %p156 = scmp.eq.s32.totalorder %s22, 7
      %p157 = por %p155, %p156
      %p159 = scmp.ne.s32.totalorder %s144, %s158
      %p160 = scmp.eq.s32.totalorder %s22, 0
      %p161 = por %p159, %p160
      %s162 = ssub.s32 %s23, %s35
      %s163 = ssub.s32 %s24, %s31
      %s164 = sor.u32 %s162, %s163
      %p165 = scmp.eq.s32.totalorder %s164, 0
      %s167 = sadd.s32 %s166, 1
      %s168 = scalar_select %p165, %s166, %s167
      %p171 = pneg %p165
      %p172 = scmp.eq.s32.totalorder %s16, 7
      %p173 = por %p171, %p172
      %p174 = scmp.ne.s32.totalorder %s166, %s169
      %p175 = scmp.eq.s32.totalorder %s16, 0
      %p176 = por %p174, %p175
      %p177 = scmp.ne.s32.totalorder %s166, %s169
      %p178 = scmp.eq.s32.totalorder %s21, 7
      %p179 = por %p177, %p178
      %p180 = scmp.ne.s32.totalorder %s169, %s170
      %p181 = scmp.eq.s32.totalorder %s21, 0
      %p182 = por %p180, %p181
      %p183 = scmp.ne.s32.totalorder %s169, %s170
      %p184 = scmp.eq.s32.totalorder %s22, 7
      %p185 = por %p183, %p184
      %p187 = scmp.ne.s32.totalorder %s170, %s186
      %p188 = scmp.eq.s32.totalorder %s22, 0
      %p189 = por %p187, %p188
      %p190 = scmp.le.s32.totalorder 1, %s16
      %p191 = scmp.lt.s32.totalorder %s16, 9
      %p192 = pnand %p190, %p191
      %p193 = pneg %p192
      // Predicated region
      $region9: #{lka_forward_nhwc.1} parent=5 // pred_check
        _
      $region10: #{lka_forward_nhwc.1} parent=5 // pred_check_branch
        %195 = sbr.rel (%p192) target = $region12
      $region11: #{lka_forward_nhwc.1} parent=5 // pred_region
        %s196 = ssub.s32 %s16, 1
        // Predicated region
        $region13: #{lka_forward_nhwc.1} parent=11 // pred_check
          %p197 = pneg %p49
        $region14: #{lka_forward_nhwc.1} parent=11 // pred_check_branch
          %199 = sbr.rel (%p197) target = $region16
        $region15: #{lka_forward_nhwc.1} parent=11 // pred_region
          _
        $region16: #{lka_forward_nhwc.1} parent=11 // pred_fallthru
          _
        // Predicated region
        $region17: #{lka_forward_nhwc.1} parent=11 // pred_check
          %p200 = pneg %p70
        $region18: #{lka_forward_nhwc.1} parent=11 // pred_check_branch
          %202 = sbr.rel (%p200) target = $region20
        $region19: #{lka_forward_nhwc.1} parent=11 // pred_region
          _
        $region20: #{lka_forward_nhwc.1} parent=11 // pred_fallthru
          _
        // Predicated region
        $region21: #{lka_forward_nhwc.1} parent=11 // pred_check
          %p203 = pneg %p91
        $region22: #{lka_forward_nhwc.1} parent=11 // pred_check_branch
          %205 = sbr.rel (%p203) target = $region24
        $region23: #{lka_forward_nhwc.1} parent=11 // pred_region
          _
        $region24: #{lka_forward_nhwc.1} parent=11 // pred_fallthru
          _
        // Predicated region
        $region25: #{lka_forward_nhwc.1} parent=11 // pred_check
          %p206 = pneg %p112
        $region26: #{lka_forward_nhwc.1} parent=11 // pred_check_branch
          %208 = sbr.rel (%p206) target = $region28
        $region27: #{lka_forward_nhwc.1} parent=11 // pred_region
          _
        $region28: #{lka_forward_nhwc.1} parent=11 // pred_fallthru
          _
        // Predicated region
        $region29: #{lka_forward_nhwc.1} parent=11 // pred_check
          %p209 = pneg %p133
        $region30: #{lka_forward_nhwc.1} parent=11 // pred_check_branch
          %211 = sbr.rel (%p209) target = $region32
        $region31: #{lka_forward_nhwc.1} parent=11 // pred_region
          _
        $region32: #{lka_forward_nhwc.1} parent=11 // pred_fallthru
          _
        // Predicated region
        $region33: #{lka_forward_nhwc.1} parent=11 // pred_check
          %p212 = pneg %p154
        $region34: #{lka_forward_nhwc.1} parent=11 // pred_check_branch
          %214 = sbr.rel (%p212) target = $region36
        $region35: #{lka_forward_nhwc.1} parent=11 // pred_region
          _
        $region36: #{lka_forward_nhwc.1} parent=11 // pred_fallthru
          _
      $region12: #{lka_forward_nhwc.1} parent=5 // pred_fallthru
        _
      %p215 = scmp.lt.s32.totalorder %s16, 8
      // Predicated region
      $region37: #{lka_forward_nhwc.1} parent=5 // pred_check
        %p216 = pneg %p215
      $region38: #{lka_forward_nhwc.1} parent=5 // pred_check_branch
        %218 = sbr.rel (%p216) target = $region40
      $region39: #{lka_forward_nhwc.1} parent=5 // pred_region
        _
      $region40: #{lka_forward_nhwc.1} parent=5 // pred_fallthru
        _
      %p219 = scmp.le.s32.totalorder 1, %s16
      %p220 = scmp.lt.s32.totalorder %s16, 9
      %p221 = pnand %p219, %p220
      %p222 = pneg %p221
      // Predicated region
      $region41: #{lka_forward_nhwc.1} parent=5 // pred_check
        _
      $region42: #{lka_forward_nhwc.1} parent=5 // pred_check_branch
        %224 = sbr.rel (%p221) target = $region44
      $region43: #{lka_forward_nhwc.1} parent=5 // pred_region
        %s225 = ssub.s32 %s16, 1
        %p226 = pneg %p49
        %p227 = pneg %p46
        %p228 = pneg %p70
        %p229 = pneg %p67
        %p230 = pneg %p91
        %p231 = pneg %p88
        %p232 = pneg %p112
        %p233 = pneg %p109
        %p234 = pneg %p133
        %p235 = pneg %p130
        %p236 = pneg %p154
        %p237 = pneg %p151
        %p238 = pneg %p182
        %p239 = pneg %p179
        %s240 = sand.u32 %s169, 1
        %s241 = scalar_lea.sflag [#allocation6], %s240
        %s242 = sand.u32 %s169, 1
        %s243 = smul.addr %s242, 64
        %s244 = scalar_lea.vmem [#allocation5], %s243
        %s245 = smul.u32 4, %s26
        %s247 = smul.u32 %s26, 4
        %s248 = smul.u32 %s247, 16
        %s249 = smul.u32 %s25, 256
        %s250 = sadd.s32 %s248, %s249
        %s251 = smul.addr %s250, 16
        %s252 = scalar_lea.hbm %s0, %s251
        %s253 = scalar_lea.vmem [#allocation2], 48
        // Predicated region
        $region45: #{lka_forward_nhwc.1} parent=43 // pred_check
          _
        $region46: #{lka_forward_nhwc.1} parent=43 // pred_check_branch
          %255 = sbr.rel target = $region48
        $region47: #{lka_forward_nhwc.1} parent=43 // pred_region
          %256 = sst [smem:[#allocation9]] [#allocation8]
          %257 = sst [smem:[#allocation10]] [#allocation7]
        $region48: #{lka_forward_nhwc.1} parent=43 // pred_fallthru
          _
        %259 = shalt.err (0)
        %s261 = sshll.u32 %s253, 4
        %s262 = int_to_ptr.vmem [resolvable:$true] %s261
        %264 = dma.hbm_to_vmem [thread:$0]  %s252, 1024, %s262, [#allocation4]
        %p265 = scmp.gt.s32.totalorder %s26, 0
        // Predicated region
        $region49: #{lka_forward_nhwc.1} parent=43 // pred_check
          %p266 = pneg %p265
        $region50: #{lka_forward_nhwc.1} parent=43 // pred_check_branch
          %268 = sbr.rel (%p266) target = $region52
        $region51: #{lka_forward_nhwc.1} parent=43 // pred_region
          %s269 = ssub.s32 %s247, 3
          %s270 = smul.u32 %s269, 16
          %s271 = sadd.s32 %s270, %s249
          %s272 = smul.addr %s271, 16
          %s273 = scalar_lea.hbm %s0, %s272
          %s274 = scalar_lea.sflag [#allocation4], 1
          // Predicated region
          $region53: #{lka_forward_nhwc.1} parent=51 // pred_check
            _
          $region54: #{lka_forward_nhwc.1} parent=51 // pred_check_branch
            %276 = sbr.rel target = $region56
          $region55: #{lka_forward_nhwc.1} parent=51 // pred_region
            %277 = sst [smem:[#allocation9]] [#allocation12]
            %278 = sst [smem:[#allocation10]] [#allocation11]
          $region56: #{lka_forward_nhwc.1} parent=51 // pred_fallthru
            _
          %280 = shalt.err (0)
          %s282 = sshll.u32 [#allocation2], 4
          %s283 = int_to_ptr.vmem [resolvable:$true] %s282
          %285 = dma.hbm_to_vmem [thread:$0]  %s273, 768, %s283, %s274
        $region52: #{lka_forward_nhwc.1} parent=43 // pred_fallthru
          _
        %p286 = scmp.lt.s32.totalorder %s26, 3
        // Predicated region
        $region57: #{lka_forward_nhwc.1} parent=43 // pred_check
          %p287 = pneg %p286
        $region58: #{lka_forward_nhwc.1} parent=43 // pred_check_branch
          %289 = sbr.rel (%p287) target = $region60
        $region59: #{lka_forward_nhwc.1} parent=43 // pred_region
          %s290 = sadd.s32 %s247, 4
          %s291 = smul.u32 %s290, 16
          %s292 = sadd.s32 %s291, %s249
          %s293 = smul.addr %s292, 16
          %s294 = scalar_lea.hbm %s0, %s293
          %s295 = scalar_lea.vmem [#allocation2], 112
          %s296 = scalar_lea.sflag [#allocation4], 2
          // Predicated region
          $region61: #{lka_forward_nhwc.1} parent=59 // pred_check
            _
          $region62: #{lka_forward_nhwc.1} parent=59 // pred_check_branch
            %298 = sbr.rel target = $region64
          $region63: #{lka_forward_nhwc.1} parent=59 // pred_region
            %299 = sst [smem:[#allocation9]] [#allocation14]
            %300 = sst [smem:[#allocation10]] [#allocation13]
          $region64: #{lka_forward_nhwc.1} parent=59 // pred_fallthru
            _
          %302 = shalt.err (0)
          %s304 = sshll.u32 %s295, 4
          %s305 = int_to_ptr.vmem [resolvable:$true] %s304
          %307 = dma.hbm_to_vmem [thread:$0]  %s294, 768, %s305, %s296
        $region60: #{lka_forward_nhwc.1} parent=43 // pred_fallthru
          _
        %p308 = scmp.eq.s32.totalorder %s26, 0
        // Predicated region
        $region65: #{lka_forward_nhwc.1} parent=43 // pred_check
          %p309 = pneg %p308
        $region66: #{lka_forward_nhwc.1} parent=43 // pred_check_branch
          %311 = sbr.rel (%p309) target = $region68
        $region67: #{lka_forward_nhwc.1} parent=43 // pred_region
          %312 = vst [vmem:[#allocation2] sm:$0xff] 0.0
          %313 = vst [vmem:[#allocation2 + $0x8] sm:$0xff] 0.0
          %314 = vst [vmem:[#allocation2 + $0x10] sm:$0xff] 0.0
          %315 = vst [vmem:[#allocation2 + $0x18] sm:$0xff] 0.0
          %316 = vst [vmem:[#allocation2 + $0x20] sm:$0xff] 0.0
          %317 = vst [vmem:[#allocation2 + $0x28] sm:$0xff] 0.0
        $region68: #{lka_forward_nhwc.1} parent=43 // pred_fallthru
          _
        %p318 = scmp.eq.s32.totalorder %s26, 3
        // Predicated region
        $region69: #{lka_forward_nhwc.1} parent=43 // pred_check
          %p319 = pneg %p318
        $region70: #{lka_forward_nhwc.1} parent=43 // pred_check_branch
          %321 = sbr.rel (%p319) target = $region72
        $region71: #{lka_forward_nhwc.1} parent=43 // pred_region
          %s322 = scalar_lea.vmem [#allocation2], 112
          %323 = vst [vmem:[%s322] sm:$0xff] 0.0
          %324 = vst [vmem:[%s322 + $0x8] sm:$0xff] 0.0
          %325 = vst [vmem:[%s322 + $0x10] sm:$0xff] 0.0
          %326 = vst [vmem:[%s322 + $0x18] sm:$0xff] 0.0
          %327 = vst [vmem:[%s322 + $0x20] sm:$0xff] 0.0
          %328 = vst [vmem:[%s322 + $0x28] sm:$0xff] 0.0
        $region72: #{lka_forward_nhwc.1} parent=43 // pred_fallthru
          _
        %s329 = smul.u32 4, 16
        %s330 = smul.u32 %s329, 1
        %s331 = sshll.u32 %s330, 4
        %332 = dma.done [#allocation4], %s331
        // Predicated region
        $region73: #{lka_forward_nhwc.1} parent=43 // pred_check
          %p333 = pneg %p265
        $region74: #{lka_forward_nhwc.1} parent=43 // pred_check_branch
          %335 = sbr.rel (%p333) target = $region76
        $region75: #{lka_forward_nhwc.1} parent=43 // pred_region
          %s336 = scalar_lea.sflag [#allocation4], 1
          %s337 = smul.u32 3, 16
          %s338 = smul.u32 %s337, 1
          %s339 = sshll.u32 %s338, 4
          %340 = dma.done %s336, %s339
        $region76: #{lka_forward_nhwc.1} parent=43 // pred_fallthru
          _
        // Predicated region
        $region77: #{lka_forward_nhwc.1} parent=43 // pred_check
          %p341 = pneg %p286
        $region78: #{lka_forward_nhwc.1} parent=43 // pred_check_branch
          %343 = sbr.rel (%p341) target = $region80
        $region79: #{lka_forward_nhwc.1} parent=43 // pred_region
          %s344 = scalar_lea.sflag [#allocation4], 2
          %s345 = smul.u32 3, 16
          %s346 = smul.u32 %s345, 1
          %s347 = sshll.u32 %s346, 4
          %348 = dma.done %s344, %s347
        $region80: #{lka_forward_nhwc.1} parent=43 // pred_fallthru
          _
        %v349 = vld [vmem:[%s1] sm:$0x7]
        %v350 = vld [vmem:[%s1 + $0x4] sm:$0x7]
        %v351 = vld [vmem:[%s1 + $0x8] sm:$0x7]
        %v352 = vld [vmem:[%s2] sm:$0x1]
        %v354 = vlaneseq
        %v355 = vshrl.u32 %v354, 7
        %v356 = vsub.s32 0, %v355
        %v357 = vrot.slane %v352, %v356
        %v359 = vld [vmem:[#allocation2] sm:$0xff]
        %v360 = vld [vmem:[#allocation2 + $0x8] sm:$0xff]
        %v361 = vld [vmem:[#allocation2 + $0x10] sm:$0xff]
        %v362 = vld [vmem:[#allocation2 + $0x18] sm:$0xff]
        %v363 = vld [vmem:[#allocation2 + $0x20] sm:$0xff]
        %v364 = vld [vmem:[#allocation2 + $0x28] sm:$0xff]
        %v365 = vld [vmem:[#allocation2 + $0x30] sm:$0xff]
        %v366 = vld [vmem:[#allocation2 + $0x38] sm:$0xff]
        %v367 = vld [vmem:[#allocation2 + $0x40] sm:$0xff]
        %v368 = vld [vmem:[#allocation2 + $0x48] sm:$0xff]
        %v369 = vld [vmem:[#allocation2 + $0x50] sm:$0xff]
        %v370 = vld [vmem:[#allocation2 + $0x58] sm:$0xff]
        %v371 = vld [vmem:[#allocation2 + $0x60] sm:$0xff]
        %v372 = vld [vmem:[#allocation2 + $0x68] sm:$0xff]
        %v373 = vld [vmem:[#allocation2 + $0x70] sm:$0xff]
        %v374 = vld [vmem:[#allocation2 + $0x78] sm:$0xff]
        %vm391 = vcmask 1040384
        %v392 = vrot.slane %v359, 7
        %v393 = vrot.slane %v360, 7
        %v394 = vsel %vm391, %v392, %v393
        %v395 = vrot.slane %v361, 7
        %v396 = vrot.slane %v362, 7
        %v397 = vsel %vm391, %v395, %v396
        %v398 = vrot.slane %v363, 7
        %v399 = vrot.slane %v364, 7
        %v400 = vsel %vm391, %v398, %v399
        %v401 = vrot.slane %v365, 7
        %v402 = vrot.slane %v366, 7
        %v403 = vsel %vm391, %v401, %v402
        %v404 = vrot.slane %v367, 7
        %v405 = vrot.slane %v368, 7
        %v406 = vsel %vm391, %v404, %v405
        %v407 = vrot.slane %v369, 7
        %v408 = vrot.slane %v370, 7
        %v409 = vsel %vm391, %v407, %v408
        %v410 = vrot.slane %v371, 7
        %v411 = vrot.slane %v372, 7
        %v412 = vsel %vm391, %v410, %v411
        %v413 = vrot.slane %v373, 7
        %v414 = vrot.slane %v374, 7
        %v415 = vsel %vm391, %v413, %v414
        %v432 = vsel %vm391, 0.0, %v392
        %v433 = vsel %vm391, 0.0, %v395
        %v434 = vsel %vm391, 0.0, %v398
        %v435 = vsel %vm391, 0.0, %v401
        %v436 = vsel %vm391, 0.0, %v404
        %v437 = vsel %vm391, 0.0, %v407
        %v438 = vsel %vm391, 0.0, %v410
        %v439 = vsel %vm391, 0.0, %v413
        %v440 = vlaneseq
        %v441 = vshrl.u32 %v440, 7
        %v442 = vsub.s32 0, %v441
        %v443 = vrot.slane %v349, %v442
        %v444 = vmul.f32 %v432, %v443
        %v445 = vmul.f32 %v394, %v443
        %v446 = vmul.f32 %v433, %v443
        %v447 = vmul.f32 %v397, %v443
        %v448 = vmul.f32 %v434, %v443
        %v449 = vmul.f32 %v400, %v443
        %v450 = vmul.f32 %v435, %v443
        %v451 = vmul.f32 %v403, %v443
        %v452 = vmul.f32 %v436, %v443
        %v453 = vmul.f32 %v406, %v443
        %v454 = vmul.f32 %v437, %v443
        %v455 = vmul.f32 %v409, %v443
        %v456 = vmul.f32 %v438, %v443
        %v457 = vmul.f32 %v412, %v443
        %v458 = vmul.f32 %v439, %v443
        %v459 = vmul.f32 %v415, %v443
        %v460 = vadd.f32 %v357, %v444
        %v461 = vadd.f32 %v357, %v445
        %v462 = vadd.f32 %v357, %v446
        %v463 = vadd.f32 %v357, %v447
        %v464 = vadd.f32 %v357, %v448
        %v465 = vadd.f32 %v357, %v449
        %v466 = vadd.f32 %v357, %v450
        %v467 = vadd.f32 %v357, %v451
        %v468 = vadd.f32 %v357, %v452
        %v469 = vadd.f32 %v357, %v453
        %v470 = vadd.f32 %v357, %v454
        %v471 = vadd.f32 %v357, %v455
        %v472 = vadd.f32 %v357, %v456
        %v473 = vadd.f32 %v357, %v457
        %v474 = vadd.f32 %v357, %v458
        %v475 = vadd.f32 %v357, %v459
        %v476 = vlaneseq
        %v477 = vshrl.u32 %v476, 7
        %v478 = vsub.s32 1, %v477
        %v479 = vrot.slane %v349, %v478
        %v480 = vmul.f32 %v359, %v479
        %v481 = vmul.f32 %v360, %v479
        %v482 = vmul.f32 %v361, %v479
        %v483 = vmul.f32 %v362, %v479
        %v484 = vmul.f32 %v363, %v479
        %v485 = vmul.f32 %v364, %v479
        %v486 = vmul.f32 %v365, %v479
        %v487 = vmul.f32 %v366, %v479
        %v488 = vmul.f32 %v367, %v479
        %v489 = vmul.f32 %v368, %v479
        %v490 = vmul.f32 %v369, %v479
        %v491 = vmul.f32 %v370, %v479
        %v492 = vmul.f32 %v371, %v479
        %v493 = vmul.f32 %v372, %v479
        %v494 = vmul.f32 %v373, %v479
        %v495 = vmul.f32 %v374, %v479
        %v496 = vadd.f32 %v460, %v480
        %v497 = vadd.f32 %v461, %v481
        %v498 = vadd.f32 %v462, %v482
        %v499 = vadd.f32 %v463, %v483
        %v500 = vadd.f32 %v464, %v484
        %v501 = vadd.f32 %v465, %v485
        %v502 = vadd.f32 %v466, %v486
        %v503 = vadd.f32 %v467, %v487
        %v504 = vadd.f32 %v468, %v488
        %v505 = vadd.f32 %v469, %v489
        %v506 = vadd.f32 %v470, %v490
        %v507 = vadd.f32 %v471, %v491
        %v508 = vadd.f32 %v472, %v492
        %v509 = vadd.f32 %v473, %v493
        %v510 = vadd.f32 %v474, %v494
        %v511 = vadd.f32 %v475, %v495
        %vm512 = vcmask 1046528
        %v513 = vrot.slane %v359, 1
        %v514 = vrot.slane %v360, 1
        %v515 = vsel %vm512, %v513, %v514
        %v516 = vrot.slane %v361, 1
        %v517 = vrot.slane %v362, 1
        %v518 = vsel %vm512, %v516, %v517
        %v519 = vrot.slane %v363, 1
        %v520 = vrot.slane %v364, 1
        %v521 = vsel %vm512, %v519, %v520
        %v522 = vrot.slane %v365, 1
        %v523 = vrot.slane %v366, 1
        %v524 = vsel %vm512, %v522, %v523
        %v525 = vrot.slane %v367, 1
        %v526 = vrot.slane %v368, 1
        %v527 = vsel %vm512, %v525, %v526
        %v528 = vrot.slane %v369, 1
        %v529 = vrot.slane %v370, 1
        %v530 = vsel %vm512, %v528, %v529
        %v531 = vrot.slane %v371, 1
        %v532 = vrot.slane %v372, 1
        %v533 = vsel %vm512, %v531, %v532
        %v534 = vrot.slane %v373, 1
        %v535 = vrot.slane %v374, 1
        %v536 = vsel %vm512, %v534, %v535
        %v553 = vsel %vm512, %v514, 0.0
        %v554 = vsel %vm512, %v517, 0.0
        %v555 = vsel %vm512, %v520, 0.0
        %v556 = vsel %vm512, %v523, 0.0
        %v557 = vsel %vm512, %v526, 0.0
        %v558 = vsel %vm512, %v529, 0.0
        %v559 = vsel %vm512, %v532, 0.0
        %v560 = vsel %vm512, %v535, 0.0
        %v561 = vlaneseq
        %v562 = vshrl.u32 %v561, 7
        %v563 = vsub.s32 2, %v562
        %v564 = vrot.slane %v349, %v563
        %v565 = vmul.f32 %v515, %v564
        %v566 = vmul.f32 %v553, %v564
        %v567 = vmul.f32 %v518, %v564
        %v568 = vmul.f32 %v554, %v564
        %v569 = vmul.f32 %v521, %v564
        %v570 = vmul.f32 %v555, %v564
        %v571 = vmul.f32 %v524, %v564
        %v572 = vmul.f32 %v556, %v564
        %v573 = vmul.f32 %v527, %v564
        %v574 = vmul.f32 %v557, %v564
        %v575 = vmul.f32 %v530, %v564
        %v576 = vmul.f32 %v558, %v564
        %v577 = vmul.f32 %v533, %v564
        %v578 = vmul.f32 %v559, %v564
        %v579 = vmul.f32 %v536, %v564
        %v580 = vmul.f32 %v560, %v564
        %v581 = vadd.f32 %v496, %v565
        %v582 = vadd.f32 %v497, %v566
        %v583 = vadd.f32 %v498, %v567
        %v584 = vadd.f32 %v499, %v568
        %v585 = vadd.f32 %v500, %v569
        %v586 = vadd.f32 %v501, %v570
        %v587 = vadd.f32 %v502, %v571
        %v588 = vadd.f32 %v503, %v572
        %v589 = vadd.f32 %v504, %v573
        %v590 = vadd.f32 %v505, %v574
        %v591 = vadd.f32 %v506, %v575
        %v592 = vadd.f32 %v507, %v576
        %v593 = vadd.f32 %v508, %v577
        %v594 = vadd.f32 %v509, %v578
        %v595 = vadd.f32 %v510, %v579
        %v596 = vadd.f32 %v511, %v580
        %s597 = scalar_lea.vmem [#allocation2], 16
        %v598 = vld [vmem:[%s597] sm:$0xff]
        %v599 = vld [vmem:[%s597 + $0x8] sm:$0xff]
        %v600 = vld [vmem:[%s597 + $0x10] sm:$0xff]
        %v601 = vld [vmem:[%s597 + $0x18] sm:$0xff]
        %v602 = vld [vmem:[%s597 + $0x20] sm:$0xff]
        %v603 = vld [vmem:[%s597 + $0x28] sm:$0xff]
        %v604 = vld [vmem:[%s597 + $0x30] sm:$0xff]
        %v605 = vld [vmem:[%s597 + $0x38] sm:$0xff]
        %v606 = vld [vmem:[%s597 + $0x40] sm:$0xff]
        %v607 = vld [vmem:[%s597 + $0x48] sm:$0xff]
        %v608 = vld [vmem:[%s597 + $0x50] sm:$0xff]
        %v609 = vld [vmem:[%s597 + $0x58] sm:$0xff]
        %v610 = vld [vmem:[%s597 + $0x60] sm:$0xff]
        %v611 = vld [vmem:[%s597 + $0x68] sm:$0xff]
        %v612 = vld [vmem:[%s597 + $0x70] sm:$0xff]
        %v613 = vld [vmem:[%s597 + $0x78] sm:$0xff]
        %v630 = vrot.slane %v598, 7
        %v631 = vrot.slane %v599, 7
        %v632 = vsel %vm391, %v630, %v631
        %v633 = vrot.slane %v600, 7
        %v634 = vrot.slane %v601, 7
        %v635 = vsel %vm391, %v633, %v634
        %v636 = vrot.slane %v602, 7
        %v637 = vrot.slane %v603, 7
        %v638 = vsel %vm391, %v636, %v637
        %v639 = vrot.slane %v604, 7
        %v640 = vrot.slane %v605, 7
        %v641 = vsel %vm391, %v639, %v640
        %v642 = vrot.slane %v606, 7
        %v643 = vrot.slane %v607, 7
        %v644 = vsel %vm391, %v642, %v643
        %v645 = vrot.slane %v608, 7
        %v646 = vrot.slane %v609, 7
        %v647 = vsel %vm391, %v645, %v646
        %v648 = vrot.slane %v610, 7
        %v649 = vrot.slane %v611, 7
        %v650 = vsel %vm391, %v648, %v649
        %v651 = vrot.slane %v612, 7
        %v652 = vrot.slane %v613, 7
        %v653 = vsel %vm391, %v651, %v652
        %v670 = vsel %vm391, 0.0, %v630
        %v671 = vsel %vm391, 0.0, %v633
        %v672 = vsel %vm391, 0.0, %v636
        %v673 = vsel %vm391, 0.0, %v639
        %v674 = vsel %vm391, 0.0, %v642
        %v675 = vsel %vm391, 0.0, %v645
        %v676 = vsel %vm391, 0.0, %v648
        %v677 = vsel %vm391, 0.0, %v651
        %v678 = vlaneseq
        %v679 = vshrl.u32 %v678, 7
        %v680 = vsub.s32 0, %v679
        %v681 = vrot.slane %v350, %v680
        %v682 = vmul.f32 %v670, %v681
        %v683 = vmul.f32 %v632, %v681
        %v684 = vmul.f32 %v671, %v681
        %v685 = vmul.f32 %v635, %v681
        %v686 = vmul.f32 %v672, %v681
        %v687 = vmul.f32 %v638, %v681
        %v688 = vmul.f32 %v673, %v681
        %v689 = vmul.f32 %v641, %v681
        %v690 = vmul.f32 %v674, %v681
        %v691 = vmul.f32 %v644, %v681
        %v692 = vmul.f32 %v675, %v681
        %v693 = vmul.f32 %v647, %v681
        %v694 = vmul.f32 %v676, %v681
        %v695 = vmul.f32 %v650, %v681
        %v696 = vmul.f32 %v677, %v681
        %v697 = vmul.f32 %v653, %v681
        %v698 = vadd.f32 %v581, %v682
        %v699 = vadd.f32 %v582, %v683
        %v700 = vadd.f32 %v583, %v684
        %v701 = vadd.f32 %v584, %v685
        %v702 = vadd.f32 %v585, %v686
        %v703 = vadd.f32 %v586, %v687
        %v704 = vadd.f32 %v587, %v688
        %v705 = vadd.f32 %v588, %v689
        %v706 = vadd.f32 %v589, %v690
        %v707 = vadd.f32 %v590, %v691
        %v708 = vadd.f32 %v591, %v692
        %v709 = vadd.f32 %v592, %v693
        %v710 = vadd.f32 %v593, %v694
        %v711 = vadd.f32 %v594, %v695
        %v712 = vadd.f32 %v595, %v696
        %v713 = vadd.f32 %v596, %v697
        %v714 = vlaneseq
        %v715 = vshrl.u32 %v714, 7
        %v716 = vsub.s32 1, %v715
        %v717 = vrot.slane %v350, %v716
        %v718 = vmul.f32 %v598, %v717
        %v719 = vmul.f32 %v599, %v717
        %v720 = vmul.f32 %v600, %v717
        %v721 = vmul.f32 %v601, %v717
        %v722 = vmul.f32 %v602, %v717
        %v723 = vmul.f32 %v603, %v717
        %v724 = vmul.f32 %v604, %v717
        %v725 = vmul.f32 %v605, %v717
        %v726 = vmul.f32 %v606, %v717
        %v727 = vmul.f32 %v607, %v717
        %v728 = vmul.f32 %v608, %v717
        %v729 = vmul.f32 %v609, %v717
        %v730 = vmul.f32 %v610, %v717
        %v731 = vmul.f32 %v611, %v717
        %v732 = vmul.f32 %v612, %v717
        %v733 = vmul.f32 %v613, %v717
        %v734 = vadd.f32 %v698, %v718
        %v735 = vadd.f32 %v699, %v719
        %v736 = vadd.f32 %v700, %v720
        %v737 = vadd.f32 %v701, %v721
        %v738 = vadd.f32 %v702, %v722
        %v739 = vadd.f32 %v703, %v723
        %v740 = vadd.f32 %v704, %v724
        %v741 = vadd.f32 %v705, %v725
        %v742 = vadd.f32 %v706, %v726
        %v743 = vadd.f32 %v707, %v727
        %v744 = vadd.f32 %v708, %v728
        %v745 = vadd.f32 %v709, %v729
        %v746 = vadd.f32 %v710, %v730
        %v747 = vadd.f32 %v711, %v731
        %v748 = vadd.f32 %v712, %v732
        %v749 = vadd.f32 %v713, %v733
        %v750 = vrot.slane %v598, 1
        %v751 = vrot.slane %v599, 1
        %v752 = vsel %vm512, %v750, %v751
        %v753 = vrot.slane %v600, 1
        %v754 = vrot.slane %v601, 1
        %v755 = vsel %vm512, %v753, %v754
        %v756 = vrot.slane %v602, 1
        %v757 = vrot.slane %v603, 1
        %v758 = vsel %vm512, %v756, %v757
        %v759 = vrot.slane %v604, 1
        %v760 = vrot.slane %v605, 1
        %v761 = vsel %vm512, %v759, %v760
        %v762 = vrot.slane %v606, 1
        %v763 = vrot.slane %v607, 1
        %v764 = vsel %vm512, %v762, %v763
        %v765 = vrot.slane %v608, 1
        %v766 = vrot.slane %v609, 1
        %v767 = vsel %vm512, %v765, %v766
        %v768 = vrot.slane %v610, 1
        %v769 = vrot.slane %v611, 1
        %v770 = vsel %vm512, %v768, %v769
        %v771 = vrot.slane %v612, 1
        %v772 = vrot.slane %v613, 1
        %v773 = vsel %vm512, %v771, %v772
        %v790 = vsel %vm512, %v751, 0.0
        %v791 = vsel %vm512, %v754, 0.0
        %v792 = vsel %vm512, %v757, 0.0
        %v793 = vsel %vm512, %v760, 0.0
        %v794 = vsel %vm512, %v763, 0.0
        %v795 = vsel %vm512, %v766, 0.0
        %v796 = vsel %vm512, %v769, 0.0
        %v797 = vsel %vm512, %v772, 0.0
        %v798 = vlaneseq
        %v799 = vshrl.u32 %v798, 7
        %v800 = vsub.s32 2, %v799
        %v801 = vrot.slane %v350, %v800
        %v802 = vmul.f32 %v752, %v801
        %v803 = vmul.f32 %v790, %v801
        %v804 = vmul.f32 %v755, %v801
        %v805 = vmul.f32 %v791, %v801
        %v806 = vmul.f32 %v758, %v801
        %v807 = vmul.f32 %v792, %v801
        %v808 = vmul.f32 %v761, %v801
        %v809 = vmul.f32 %v793, %v801
        %v810 = vmul.f32 %v764, %v801
        %v811 = vmul.f32 %v794, %v801
        %v812 = vmul.f32 %v767, %v801
        %v813 = vmul.f32 %v795, %v801
        %v814 = vmul.f32 %v770, %v801
        %v815 = vmul.f32 %v796, %v801
        %v816 = vmul.f32 %v773, %v801
        %v817 = vmul.f32 %v797, %v801
        %v818 = vadd.f32 %v734, %v802
        %v819 = vadd.f32 %v735, %v803
        %v820 = vadd.f32 %v736, %v804
        %v821 = vadd.f32 %v737, %v805
        %v822 = vadd.f32 %v738, %v806
        %v823 = vadd.f32 %v739, %v807
        %v824 = vadd.f32 %v740, %v808
        %v825 = vadd.f32 %v741, %v809
        %v826 = vadd.f32 %v742, %v810
        %v827 = vadd.f32 %v743, %v811
        %v828 = vadd.f32 %v744, %v812
        %v829 = vadd.f32 %v745, %v813
        %v830 = vadd.f32 %v746, %v814
        %v831 = vadd.f32 %v747, %v815
        %v832 = vadd.f32 %v748, %v816
        %v833 = vadd.f32 %v749, %v817
        %s834 = scalar_lea.vmem [#allocation2], 32
        %v835 = vld [vmem:[%s834] sm:$0xff]
        %v836 = vld [vmem:[%s834 + $0x8] sm:$0xff]
        %v837 = vld [vmem:[%s834 + $0x10] sm:$0xff]
        %v838 = vld [vmem:[%s834 + $0x18] sm:$0xff]
        %v839 = vld [vmem:[%s834 + $0x20] sm:$0xff]
        %v840 = vld [vmem:[%s834 + $0x28] sm:$0xff]
        %v841 = vld [vmem:[%s834 + $0x30] sm:$0xff]
        %v842 = vld [vmem:[%s834 + $0x38] sm:$0xff]
        %v843 = vld [vmem:[%s834 + $0x40] sm:$0xff]
        %v844 = vld [vmem:[%s834 + $0x48] sm:$0xff]
        %v845 = vld [vmem:[%s834 + $0x50] sm:$0xff]
        %v846 = vld [vmem:[%s834 + $0x58] sm:$0xff]
        %v847 = vld [vmem:[%s834 + $0x60] sm:$0xff]
        %v848 = vld [vmem:[%s834 + $0x68] sm:$0xff]
        %v849 = vld [vmem:[%s834 + $0x70] sm:$0xff]
        %v850 = vld [vmem:[%s834 + $0x78] sm:$0xff]
        %v867 = vrot.slane %v835, 7
        %v868 = vrot.slane %v836, 7
        %v869 = vsel %vm391, %v867, %v868
        %v870 = vrot.slane %v837, 7
        %v871 = vrot.slane %v838, 7
        %v872 = vsel %vm391, %v870, %v871
        %v873 = vrot.slane %v839, 7
        %v874 = vrot.slane %v840, 7
        %v875 = vsel %vm391, %v873, %v874
        %v876 = vrot.slane %v841, 7
        %v877 = vrot.slane %v842, 7
        %v878 = vsel %vm391, %v876, %v877
        %v879 = vrot.slane %v843, 7
        %v880 = vrot.slane %v844, 7
        %v881 = vsel %vm391, %v879, %v880
        %v882 = vrot.slane %v845, 7
        %v883 = vrot.slane %v846, 7
        %v884 = vsel %vm391, %v882, %v883
        %v885 = vrot.slane %v847, 7
        %v886 = vrot.slane %v848, 7
        %v887 = vsel %vm391, %v885, %v886
        %v888 = vrot.slane %v849, 7
        %v889 = vrot.slane %v850, 7
        %v890 = vsel %vm391, %v888, %v889
        %v907 = vsel %vm391, 0.0, %v867
        %v908 = vsel %vm391, 0.0, %v870
        %v909 = vsel %vm391, 0.0, %v873
        %v910 = vsel %vm391, 0.0, %v876
        %v911 = vsel %vm391, 0.0, %v879
        %v912 = vsel %vm391, 0.0, %v882
        %v913 = vsel %vm391, 0.0, %v885
        %v914 = vsel %vm391, 0.0, %v888
        %v915 = vlaneseq
        %v916 = vshrl.u32 %v915, 7
        %v917 = vsub.s32 0, %v916
        %v918 = vrot.slane %v351, %v917
        %v919 = vmul.f32 %v907, %v918
        %v920 = vmul.f32 %v869, %v918
        %v921 = vmul.f32 %v908, %v918
        %v922 = vmul.f32 %v872, %v918
        %v923 = vmul.f32 %v909, %v918
        %v924 = vmul.f32 %v875, %v918
        %v925 = vmul.f32 %v910, %v918
        %v926 = vmul.f32 %v878, %v918
        %v927 = vmul.f32 %v911, %v918
        %v928 = vmul.f32 %v881, %v918
        %v929 = vmul.f32 %v912, %v918
        %v930 = vmul.f32 %v884, %v918
        %v931 = vmul.f32 %v913, %v918
        %v932 = vmul.f32 %v887, %v918
        %v933 = vmul.f32 %v914, %v918
        %v934 = vmul.f32 %v890, %v918
        %v935 = vadd.f32 %v818, %v919
        %v936 = vadd.f32 %v819, %v920
        %v937 = vadd.f32 %v820, %v921
        %v938 = vadd.f32 %v821, %v922
        %v939 = vadd.f32 %v822, %v923
        %v940 = vadd.f32 %v823, %v924
        %v941 = vadd.f32 %v824, %v925
        %v942 = vadd.f32 %v825, %v926
        %v943 = vadd.f32 %v826, %v927
        %v944 = vadd.f32 %v827, %v928
        %v945 = vadd.f32 %v828, %v929
        %v946 = vadd.f32 %v829, %v930
        %v947 = vadd.f32 %v830, %v931
        %v948 = vadd.f32 %v831, %v932
        %v949 = vadd.f32 %v832, %v933
        %v950 = vadd.f32 %v833, %v934
        %v951 = vlaneseq
        %v952 = vshrl.u32 %v951, 7
        %v953 = vsub.s32 1, %v952
        %v954 = vrot.slane %v351, %v953
        %v955 = vmul.f32 %v835, %v954
        %v956 = vmul.f32 %v836, %v954
        %v957 = vmul.f32 %v837, %v954
        %v958 = vmul.f32 %v838, %v954
        %v959 = vmul.f32 %v839, %v954
        %v960 = vmul.f32 %v840, %v954
        %v961 = vmul.f32 %v841, %v954
        %v962 = vmul.f32 %v842, %v954
        %v963 = vmul.f32 %v843, %v954
        %v964 = vmul.f32 %v844, %v954
        %v965 = vmul.f32 %v845, %v954
        %v966 = vmul.f32 %v846, %v954
        %v967 = vmul.f32 %v847, %v954
        %v968 = vmul.f32 %v848, %v954
        %v969 = vmul.f32 %v849, %v954
        %v970 = vmul.f32 %v850, %v954
        %v971 = vadd.f32 %v935, %v955
        %v972 = vadd.f32 %v936, %v956
        %v973 = vadd.f32 %v937, %v957
        %v974 = vadd.f32 %v938, %v958
        %v975 = vadd.f32 %v939, %v959
        %v976 = vadd.f32 %v940, %v960
        %v977 = vadd.f32 %v941, %v961
        %v978 = vadd.f32 %v942, %v962
        %v979 = vadd.f32 %v943, %v963
        %v980 = vadd.f32 %v944, %v964
        %v981 = vadd.f32 %v945, %v965
        %v982 = vadd.f32 %v946, %v966
        %v983 = vadd.f32 %v947, %v967
        %v984 = vadd.f32 %v948, %v968
        %v985 = vadd.f32 %v949, %v969
        %v986 = vadd.f32 %v950, %v970
        %v987 = vrot.slane %v835, 1
        %v988 = vrot.slane %v836, 1
        %v989 = vsel %vm512, %v987, %v988
        %v990 = vrot.slane %v837, 1
        %v991 = vrot.slane %v838, 1
        %v992 = vsel %vm512, %v990, %v991
        %v993 = vrot.slane %v839, 1
        %v994 = vrot.slane %v840, 1
        %v995 = vsel %vm512, %v993, %v994
        %v996 = vrot.slane %v841, 1
        %v997 = vrot.slane %v842, 1
        %v998 = vsel %vm512, %v996, %v997
        %v999 = vrot.slane %v843, 1
        %v1000 = vrot.slane %v844, 1
        %v1001 = vsel %vm512, %v999, %v1000
        %v1002 = vrot.slane %v845, 1
        %v1003 = vrot.slane %v846, 1
        %v1004 = vsel %vm512, %v1002, %v1003
        %v1005 = vrot.slane %v847, 1
        %v1006 = vrot.slane %v848, 1
        %v1007 = vsel %vm512, %v1005, %v1006
        %v1008 = vrot.slane %v849, 1
        %v1009 = vrot.slane %v850, 1
        %v1010 = vsel %vm512, %v1008, %v1009
        %v1027 = vsel %vm512, %v988, 0.0
        %v1028 = vsel %vm512, %v991, 0.0
        %v1029 = vsel %vm512, %v994, 0.0
        %v1030 = vsel %vm512, %v997, 0.0
        %v1031 = vsel %vm512, %v1000, 0.0
        %v1032 = vsel %vm512, %v1003, 0.0
        %v1033 = vsel %vm512, %v1006, 0.0
        %v1034 = vsel %vm512, %v1009, 0.0
        %v1035 = vlaneseq
        %v1036 = vshrl.u32 %v1035, 7
        %v1037 = vsub.s32 2, %v1036
        %v1038 = vrot.slane %v351, %v1037
        %v1039 = vmul.f32 %v989, %v1038
        %v1040 = vmul.f32 %v1027, %v1038
        %v1041 = vmul.f32 %v992, %v1038
        %v1042 = vmul.f32 %v1028, %v1038
        %v1043 = vmul.f32 %v995, %v1038
        %v1044 = vmul.f32 %v1029, %v1038
        %v1045 = vmul.f32 %v998, %v1038
        %v1046 = vmul.f32 %v1030, %v1038
        %v1047 = vmul.f32 %v1001, %v1038
        %v1048 = vmul.f32 %v1031, %v1038
        %v1049 = vmul.f32 %v1004, %v1038
        %v1050 = vmul.f32 %v1032, %v1038
        %v1051 = vmul.f32 %v1007, %v1038
        %v1052 = vmul.f32 %v1033, %v1038
        %v1053 = vmul.f32 %v1010, %v1038
        %v1054 = vmul.f32 %v1034, %v1038
        %v1055 = vadd.f32 %v971, %v1039
        %v1056 = vadd.f32 %v972, %v1040
        %v1057 = vadd.f32 %v973, %v1041
        %v1058 = vadd.f32 %v974, %v1042
        %v1059 = vadd.f32 %v975, %v1043
        %v1060 = vadd.f32 %v976, %v1044
        %v1061 = vadd.f32 %v977, %v1045
        %v1062 = vadd.f32 %v978, %v1046
        %v1063 = vadd.f32 %v979, %v1047
        %v1064 = vadd.f32 %v980, %v1048
        %v1065 = vadd.f32 %v981, %v1049
        %v1066 = vadd.f32 %v982, %v1050
        %v1067 = vadd.f32 %v983, %v1051
        %v1068 = vadd.f32 %v984, %v1052
        %v1069 = vadd.f32 %v985, %v1053
        %v1070 = vadd.f32 %v986, %v1054
        %s1071 = ssub.s32 %s247, 2
        %v1072 = vstv %s1071
        %v1073 = vadd.s32 %v1072, 1
        %v1074 = vadd.s32 %v1072, 2
        %v1075 = vadd.s32 %v1072, 3
        %v1076 = vadd.s32 %v1072, 4
        %v1077 = vadd.s32 %v1072, 5
        %v1078 = vadd.s32 %v1072, 6
        %v1079 = vadd.s32 %v1072, 7
        %vm1080 = vcmp.ge.s32.totalorder %v1072, 0
        %vm1081 = vcmp.ge.s32.totalorder %v1073, 0
        %vm1082 = vcmp.ge.s32.totalorder %v1074, 0
        %vm1083 = vcmp.ge.s32.totalorder %v1075, 0
        %vm1084 = vcmp.ge.s32.totalorder %v1076, 0
        %vm1085 = vcmp.ge.s32.totalorder %v1077, 0
        %vm1086 = vcmp.ge.s32.totalorder %v1078, 0
        %vm1087 = vcmp.ge.s32.totalorder %v1079, 0
        %vm1088 = vcmp.lt.s32.totalorder %v1072, 16
        %vm1089 = vcmp.lt.s32.totalorder %v1073, 16
        %vm1090 = vcmp.lt.s32.totalorder %v1074, 16
        %vm1091 = vcmp.lt.s32.totalorder %v1075, 16
        %vm1092 = vcmp.lt.s32.totalorder %v1076, 16
        %vm1093 = vcmp.lt.s32.totalorder %v1077, 16
        %vm1094 = vcmp.lt.s32.totalorder %v1078, 16
        %vm1095 = vcmp.lt.s32.totalorder %v1079, 16
        %vm1096 = vmand %vm1080, %vm1088
        %vm1097 = vmand %vm1081, %vm1089
        %vm1098 = vmand %vm1082, %vm1090
        %vm1099 = vmand %vm1083, %vm1091
        %vm1100 = vmand %vm1084, %vm1092
        %vm1101 = vmand %vm1085, %vm1093
        %vm1102 = vmand %vm1086, %vm1094
        %vm1103 = vmand %vm1087, %vm1095
        %v1104 = vsel %vm1096, %v1055, 0.0
        %v1105 = vsel %vm1096, %v1056, 0.0
        %v1106 = vsel %vm1097, %v1057, 0.0
        %v1107 = vsel %vm1097, %v1058, 0.0
        %v1108 = vsel %vm1098, %v1059, 0.0
        %v1109 = vsel %vm1098, %v1060, 0.0
        %v1110 = vsel %vm1099, %v1061, 0.0
        %v1111 = vsel %vm1099, %v1062, 0.0
        %v1112 = vsel %vm1100, %v1063, 0.0
        %v1113 = vsel %vm1100, %v1064, 0.0
        %v1114 = vsel %vm1101, %v1065, 0.0
        %v1115 = vsel %vm1101, %v1066, 0.0
        %v1116 = vsel %vm1102, %v1067, 0.0
        %v1117 = vsel %vm1102, %v1068, 0.0
        %v1118 = vsel %vm1103, %v1069, 0.0
        %v1119 = vsel %vm1103, %v1070, 0.0
        %1120 = vst [vmem:[#allocation3] sm:$0x3] 0.0
        %1121 = vst [vmem:[#allocation3 + $0x18] sm:$0x3] 0.0
        %1122 = vst [vmem:[#allocation3 + $0x30] sm:$0x3] 0.0
        %1123 = vst [vmem:[#allocation3 + $0x48] sm:$0x3] 0.0
        %1124 = vst [vmem:[#allocation3 + $0x60] sm:$0x3] 0.0
        %1125 = vst [vmem:[#allocation3 + $0x78] sm:$0x3] 0.0
        %1126 = vst [vmem:[#allocation3 + $0x90] sm:$0x3] 0.0
        %1127 = vst [vmem:[#allocation3 + $0xa8] sm:$0x3] 0.0
        %1128 = vst [vmem:[#allocation3 + $0x12] sm:$0x3] 0.0
        %1129 = vst [vmem:[#allocation3 + $0x2a] sm:$0x3] 0.0
        %1130 = vst [vmem:[#allocation3 + $0x42] sm:$0x3] 0.0
        %1131 = vst [vmem:[#allocation3 + $0x5a] sm:$0x3] 0.0
        %1132 = vst [vmem:[#allocation3 + $0x72] sm:$0x3] 0.0
        %1133 = vst [vmem:[#allocation3 + $0x8a] sm:$0x3] 0.0
        %1134 = vst [vmem:[#allocation3 + $0xa2] sm:$0x3] 0.0
        %1135 = vst [vmem:[#allocation3 + $0xba] sm:$0x3] 0.0
        %1136 = vst [vmem:[#allocation3 + $0x2] sm:$0xff] %v1104
        %1137 = vst [vmem:[#allocation3 + $0xa] sm:$0xff] %v1105
        %1138 = vst [vmem:[#allocation3 + $0x1a] sm:$0xff] %v1106
        %1139 = vst [vmem:[#allocation3 + $0x22] sm:$0xff] %v1107
        %1140 = vst [vmem:[#allocation3 + $0x32] sm:$0xff] %v1108
        %1141 = vst [vmem:[#allocation3 + $0x3a] sm:$0xff] %v1109
        %1142 = vst [vmem:[#allocation3 + $0x4a] sm:$0xff] %v1110
        %1143 = vst [vmem:[#allocation3 + $0x52] sm:$0xff] %v1111
        %1144 = vst [vmem:[#allocation3 + $0x62] sm:$0xff] %v1112
        %1145 = vst [vmem:[#allocation3 + $0x6a] sm:$0xff] %v1113
        %1146 = vst [vmem:[#allocation3 + $0x7a] sm:$0xff] %v1114
        %1147 = vst [vmem:[#allocation3 + $0x82] sm:$0xff] %v1115
        %1148 = vst [vmem:[#allocation3 + $0x92] sm:$0xff] %v1116
        %1149 = vst [vmem:[#allocation3 + $0x9a] sm:$0xff] %v1117
        %1150 = vst [vmem:[#allocation3 + $0xaa] sm:$0xff] %v1118
        %1151 = vst [vmem:[#allocation3 + $0xb2] sm:$0xff] %v1119
        %v1152 = vld [vmem:[%s4] sm:$0x1]
        %v1154 = vlaneseq
        %v1155 = vshrl.u32 %v1154, 7
        %v1156 = vsub.s32 0, %v1155
        %v1157 = vrot.slane %v1152, %v1156
        %v1159 = vld [vmem:[%s3] sm:$0x7]
        %v1160 = vld [vmem:[#allocation3] sm:$0xff]
        %v1161 = vld [vmem:[#allocation3 + $0x8] sm:$0xff]
        %v1162 = vld [vmem:[#allocation3 + $0x18] sm:$0xff]
        %v1163 = vld [vmem:[#allocation3 + $0x20] sm:$0xff]
        %v1164 = vld [vmem:[#allocation3 + $0x30] sm:$0xff]
        %v1165 = vld [vmem:[#allocation3 + $0x38] sm:$0xff]
        %v1166 = vld [vmem:[#allocation3 + $0x48] sm:$0xff]
        %v1167 = vld [vmem:[#allocation3 + $0x50] sm:$0xff]
        %v1168 = vlaneseq
        %v1169 = vshrl.u32 %v1168, 7
        %v1170 = vsub.s32 0, %v1169
        %v1171 = vrot.slane %v1159, %v1170
        %v1172 = vmul.f32 %v1160, %v1171
        %v1173 = vmul.f32 %v1161, %v1171
        %v1174 = vmul.f32 %v1162, %v1171
        %v1175 = vmul.f32 %v1163, %v1171
        %v1176 = vmul.f32 %v1164, %v1171
        %v1177 = vmul.f32 %v1165, %v1171
        %v1178 = vmul.f32 %v1166, %v1171
        %v1179 = vmul.f32 %v1167, %v1171
        %v1180 = vadd.f32 %v1157, %v1172
        %v1181 = vadd.f32 %v1157, %v1173
        %v1182 = vadd.f32 %v1157, %v1174
        %v1183 = vadd.f32 %v1157, %v1175
        %v1184 = vadd.f32 %v1157, %v1176
        %v1185 = vadd.f32 %v1157, %v1177
        %v1186 = vadd.f32 %v1157, %v1178
        %v1187 = vadd.f32 %v1157, %v1179
        %v1188 = vld [vmem:[#allocation3 + $0x2] sm:$0xff]
        %v1189 = vld [vmem:[#allocation3 + $0xa] sm:$0xff]
        %v1190 = vld [vmem:[#allocation3 + $0x1a] sm:$0xff]
        %v1191 = vld [vmem:[#allocation3 + $0x22] sm:$0xff]
        %v1192 = vld [vmem:[#allocation3 + $0x32] sm:$0xff]
        %v1193 = vld [vmem:[#allocation3 + $0x3a] sm:$0xff]
        %v1194 = vld [vmem:[#allocation3 + $0x4a] sm:$0xff]
        %v1195 = vld [vmem:[#allocation3 + $0x52] sm:$0xff]
        %v1196 = vlaneseq
        %v1197 = vshrl.u32 %v1196, 7
        %v1198 = vsub.s32 1, %v1197
        %v1199 = vrot.slane %v1159, %v1198
        %v1200 = vmul.f32 %v1188, %v1199
        %v1201 = vmul.f32 %v1189, %v1199
        %v1202 = vmul.f32 %v1190, %v1199
        %v1203 = vmul.f32 %v1191, %v1199
        %v1204 = vmul.f32 %v1192, %v1199
        %v1205 = vmul.f32 %v1193, %v1199
        %v1206 = vmul.f32 %v1194, %v1199
        %v1207 = vmul.f32 %v1195, %v1199
        %v1208 = vadd.f32 %v1180, %v1200
        %v1209 = vadd.f32 %v1181, %v1201
        %v1210 = vadd.f32 %v1182, %v1202
        %v1211 = vadd.f32 %v1183, %v1203
        %v1212 = vadd.f32 %v1184, %v1204
        %v1213 = vadd.f32 %v1185, %v1205
        %v1214 = vadd.f32 %v1186, %v1206
        %v1215 = vadd.f32 %v1187, %v1207
        %v1216 = vld [vmem:[#allocation3 + $0x4] sm:$0xff]
        %v1217 = vld [vmem:[#allocation3 + $0xc] sm:$0xff]
        %v1218 = vld [vmem:[#allocation3 + $0x1c] sm:$0xff]
        %v1219 = vld [vmem:[#allocation3 + $0x24] sm:$0xff]
        %v1220 = vld [vmem:[#allocation3 + $0x34] sm:$0xff]
        %v1221 = vld [vmem:[#allocation3 + $0x3c] sm:$0xff]
        %v1222 = vld [vmem:[#allocation3 + $0x4c] sm:$0xff]
        %v1223 = vld [vmem:[#allocation3 + $0x54] sm:$0xff]
        %v1224 = vlaneseq
        %v1225 = vshrl.u32 %v1224, 7
        %v1226 = vsub.s32 2, %v1225
        %v1227 = vrot.slane %v1159, %v1226
        %v1228 = vmul.f32 %v1216, %v1227
        %v1229 = vmul.f32 %v1217, %v1227
        %v1230 = vmul.f32 %v1218, %v1227
        %v1231 = vmul.f32 %v1219, %v1227
        %v1232 = vmul.f32 %v1220, %v1227
        %v1233 = vmul.f32 %v1221, %v1227
        %v1234 = vmul.f32 %v1222, %v1227
        %v1235 = vmul.f32 %v1223, %v1227
        %v1236 = vadd.f32 %v1208, %v1228
        %v1237 = vadd.f32 %v1209, %v1229
        %v1238 = vadd.f32 %v1210, %v1230
        %v1239 = vadd.f32 %v1211, %v1231
        %v1240 = vadd.f32 %v1212, %v1232
        %v1241 = vadd.f32 %v1213, %v1233
        %v1242 = vadd.f32 %v1214, %v1234
        %v1243 = vadd.f32 %v1215, %v1235
        %s1244 = scalar_lea.vmem %s3, 4
        %v1245 = vld [vmem:[%s1244] sm:$0x7]
        %s1246 = scalar_lea.vmem [#allocation3], 48
        %v1247 = vld [vmem:[%s1246] sm:$0xff]
        %v1248 = vld [vmem:[%s1246 + $0x8] sm:$0xff]
        %v1249 = vld [vmem:[%s1246 + $0x18] sm:$0xff]
        %v1250 = vld [vmem:[%s1246 + $0x20] sm:$0xff]
        %v1251 = vld [vmem:[%s1246 + $0x30] sm:$0xff]
        %v1252 = vld [vmem:[%s1246 + $0x38] sm:$0xff]
        %v1253 = vld [vmem:[%s1246 + $0x48] sm:$0xff]
        %v1254 = vld [vmem:[%s1246 + $0x50] sm:$0xff]
        %v1255 = vlaneseq
        %v1256 = vshrl.u32 %v1255, 7
        %v1257 = vsub.s32 0, %v1256
        %v1258 = vrot.slane %v1245, %v1257
        %v1259 = vmul.f32 %v1247, %v1258
        %v1260 = vmul.f32 %v1248, %v1258
        %v1261 = vmul.f32 %v1249, %v1258
        %v1262 = vmul.f32 %v1250, %v1258
        %v1263 = vmul.f32 %v1251, %v1258
        %v1264 = vmul.f32 %v1252, %v1258
        %v1265 = vmul.f32 %v1253, %v1258
        %v1266 = vmul.f32 %v1254, %v1258
        %v1267 = vadd.f32 %v1236, %v1259
        %v1268 = vadd.f32 %v1237, %v1260
        %v1269 = vadd.f32 %v1238, %v1261
        %v1270 = vadd.f32 %v1239, %v1262
        %v1271 = vadd.f32 %v1240, %v1263
        %v1272 = vadd.f32 %v1241, %v1264
        %v1273 = vadd.f32 %v1242, %v1265
        %v1274 = vadd.f32 %v1243, %v1266
        %v1275 = vld [vmem:[%s1246 + $0x2] sm:$0xff]
        %v1276 = vld [vmem:[%s1246 + $0xa] sm:$0xff]
        %v1277 = vld [vmem:[%s1246 + $0x1a] sm:$0xff]
        %v1278 = vld [vmem:[%s1246 + $0x22] sm:$0xff]
        %v1279 = vld [vmem:[%s1246 + $0x32] sm:$0xff]
        %v1280 = vld [vmem:[%s1246 + $0x3a] sm:$0xff]
        %v1281 = vld [vmem:[%s1246 + $0x4a] sm:$0xff]
        %v1282 = vld [vmem:[%s1246 + $0x52] sm:$0xff]
        %v1283 = vlaneseq
        %v1284 = vshrl.u32 %v1283, 7
        %v1285 = vsub.s32 1, %v1284
        %v1286 = vrot.slane %v1245, %v1285
        %v1287 = vmul.f32 %v1275, %v1286
        %v1288 = vmul.f32 %v1276, %v1286
        %v1289 = vmul.f32 %v1277, %v1286
        %v1290 = vmul.f32 %v1278, %v1286
        %v1291 = vmul.f32 %v1279, %v1286
        %v1292 = vmul.f32 %v1280, %v1286
        %v1293 = vmul.f32 %v1281, %v1286
        %v1294 = vmul.f32 %v1282, %v1286
        %v1295 = vadd.f32 %v1267, %v1287
        %v1296 = vadd.f32 %v1268, %v1288
        %v1297 = vadd.f32 %v1269, %v1289
        %v1298 = vadd.f32 %v1270, %v1290
        %v1299 = vadd.f32 %v1271, %v1291
        %v1300 = vadd.f32 %v1272, %v1292
        %v1301 = vadd.f32 %v1273, %v1293
        %v1302 = vadd.f32 %v1274, %v1294
        %v1303 = vld [vmem:[%s1246 + $0x4] sm:$0xff]
        %v1304 = vld [vmem:[%s1246 + $0xc] sm:$0xff]
        %v1305 = vld [vmem:[%s1246 + $0x1c] sm:$0xff]
        %v1306 = vld [vmem:[%s1246 + $0x24] sm:$0xff]
        %v1307 = vld [vmem:[%s1246 + $0x34] sm:$0xff]
        %v1308 = vld [vmem:[%s1246 + $0x3c] sm:$0xff]
        %v1309 = vld [vmem:[%s1246 + $0x4c] sm:$0xff]
        %v1310 = vld [vmem:[%s1246 + $0x54] sm:$0xff]
        %v1311 = vlaneseq
        %v1312 = vshrl.u32 %v1311, 7
        %v1313 = vsub.s32 2, %v1312
        %v1314 = vrot.slane %v1245, %v1313
        %v1315 = vmul.f32 %v1303, %v1314
        %v1316 = vmul.f32 %v1304, %v1314
        %v1317 = vmul.f32 %v1305, %v1314
        %v1318 = vmul.f32 %v1306, %v1314
        %v1319 = vmul.f32 %v1307, %v1314
        %v1320 = vmul.f32 %v1308, %v1314
        %v1321 = vmul.f32 %v1309, %v1314
        %v1322 = vmul.f32 %v1310, %v1314
        %v1323 = vadd.f32 %v1295, %v1315
        %v1324 = vadd.f32 %v1296, %v1316
        %v1325 = vadd.f32 %v1297, %v1317
        %v1326 = vadd.f32 %v1298, %v1318
        %v1327 = vadd.f32 %v1299, %v1319
        %v1328 = vadd.f32 %v1300, %v1320
        %v1329 = vadd.f32 %v1301, %v1321
        %v1330 = vadd.f32 %v1302, %v1322
        %s1331 = scalar_lea.vmem %s3, 8
        %v1332 = vld [vmem:[%s1331] sm:$0x7]
        %s1333 = scalar_lea.vmem [#allocation3], 96
        %v1334 = vld [vmem:[%s1333] sm:$0xff]
        %v1335 = vld [vmem:[%s1333 + $0x8] sm:$0xff]
        %v1336 = vld [vmem:[%s1333 + $0x18] sm:$0xff]
        %v1337 = vld [vmem:[%s1333 + $0x20] sm:$0xff]
        %v1338 = vld [vmem:[%s1333 + $0x30] sm:$0xff]
        %v1339 = vld [vmem:[%s1333 + $0x38] sm:$0xff]
        %v1340 = vld [vmem:[%s1333 + $0x48] sm:$0xff]
        %v1341 = vld [vmem:[%s1333 + $0x50] sm:$0xff]
        %v1342 = vlaneseq
        %v1343 = vshrl.u32 %v1342, 7
        %v1344 = vsub.s32 0, %v1343
        %v1345 = vrot.slane %v1332, %v1344
        %v1346 = vmul.f32 %v1334, %v1345
        %v1347 = vmul.f32 %v1335, %v1345
        %v1348 = vmul.f32 %v1336, %v1345
        %v1349 = vmul.f32 %v1337, %v1345
        %v1350 = vmul.f32 %v1338, %v1345
        %v1351 = vmul.f32 %v1339, %v1345
        %v1352 = vmul.f32 %v1340, %v1345
        %v1353 = vmul.f32 %v1341, %v1345
        %v1354 = vadd.f32 %v1323, %v1346
        %v1355 = vadd.f32 %v1324, %v1347
        %v1356 = vadd.f32 %v1325, %v1348
        %v1357 = vadd.f32 %v1326, %v1349
        %v1358 = vadd.f32 %v1327, %v1350
        %v1359 = vadd.f32 %v1328, %v1351
        %v1360 = vadd.f32 %v1329, %v1352
        %v1361 = vadd.f32 %v1330, %v1353
        %v1362 = vld [vmem:[%s1333 + $0x2] sm:$0xff]
        %v1363 = vld [vmem:[%s1333 + $0xa] sm:$0xff]
        %v1364 = vld [vmem:[%s1333 + $0x1a] sm:$0xff]
        %v1365 = vld [vmem:[%s1333 + $0x22] sm:$0xff]
        %v1366 = vld [vmem:[%s1333 + $0x32] sm:$0xff]
        %v1367 = vld [vmem:[%s1333 + $0x3a] sm:$0xff]
        %v1368 = vld [vmem:[%s1333 + $0x4a] sm:$0xff]
        %v1369 = vld [vmem:[%s1333 + $0x52] sm:$0xff]
        %v1370 = vlaneseq
        %v1371 = vshrl.u32 %v1370, 7
        %v1372 = vsub.s32 1, %v1371
        %v1373 = vrot.slane %v1332, %v1372
        %v1374 = vmul.f32 %v1362, %v1373
        %v1375 = vmul.f32 %v1363, %v1373
        %v1376 = vmul.f32 %v1364, %v1373
        %v1377 = vmul.f32 %v1365, %v1373
        %v1378 = vmul.f32 %v1366, %v1373
        %v1379 = vmul.f32 %v1367, %v1373
        %v1380 = vmul.f32 %v1368, %v1373
        %v1381 = vmul.f32 %v1369, %v1373
        %v1382 = vadd.f32 %v1354, %v1374
        %v1383 = vadd.f32 %v1355, %v1375
        %v1384 = vadd.f32 %v1356, %v1376
        %v1385 = vadd.f32 %v1357, %v1377
        %v1386 = vadd.f32 %v1358, %v1378
        %v1387 = vadd.f32 %v1359, %v1379
        %v1388 = vadd.f32 %v1360, %v1380
        %v1389 = vadd.f32 %v1361, %v1381
        %v1390 = vld [vmem:[%s1333 + $0x4] sm:$0xff]
        %v1391 = vld [vmem:[%s1333 + $0xc] sm:$0xff]
        %v1392 = vld [vmem:[%s1333 + $0x1c] sm:$0xff]
        %v1393 = vld [vmem:[%s1333 + $0x24] sm:$0xff]
        %v1394 = vld [vmem:[%s1333 + $0x34] sm:$0xff]
        %v1395 = vld [vmem:[%s1333 + $0x3c] sm:$0xff]
        %v1396 = vld [vmem:[%s1333 + $0x4c] sm:$0xff]
        %v1397 = vld [vmem:[%s1333 + $0x54] sm:$0xff]
        %v1398 = vlaneseq
        %v1399 = vshrl.u32 %v1398, 7
        %v1400 = vsub.s32 2, %v1399
        %v1401 = vrot.slane %v1332, %v1400
        %v1402 = vmul.f32 %v1390, %v1401
        %v1403 = vmul.f32 %v1391, %v1401
        %v1404 = vmul.f32 %v1392, %v1401
        %v1405 = vmul.f32 %v1393, %v1401
        %v1406 = vmul.f32 %v1394, %v1401
        %v1407 = vmul.f32 %v1395, %v1401
        %v1408 = vmul.f32 %v1396, %v1401
        %v1409 = vmul.f32 %v1397, %v1401
        %v1410 = vadd.f32 %v1382, %v1402
        %v1411 = vadd.f32 %v1383, %v1403
        %v1412 = vadd.f32 %v1384, %v1404
        %v1413 = vadd.f32 %v1385, %v1405
        %v1414 = vadd.f32 %v1386, %v1406
        %v1415 = vadd.f32 %v1387, %v1407
        %v1416 = vadd.f32 %v1388, %v1408
        %v1417 = vadd.f32 %v1389, %v1409
        %v1418 = vld [vmem:[%s253] sm:$0xff]
        %v1419 = vld [vmem:[%s253 + $0x8] sm:$0xff]
        %v1420 = vld [vmem:[%s253 + $0x10] sm:$0xff]
        %v1421 = vld [vmem:[%s253 + $0x18] sm:$0xff]
        %v1422 = vld [vmem:[%s253 + $0x20] sm:$0xff]
        %v1423 = vld [vmem:[%s253 + $0x28] sm:$0xff]
        %v1424 = vld [vmem:[%s253 + $0x30] sm:$0xff]
        %v1425 = vld [vmem:[%s253 + $0x38] sm:$0xff]
        %v1426 = vpack.c.bf16 %v1411, %v1410
        %v1427 = vpack.c.bf16 %v1413, %v1412
        %v1428 = vpack.c.bf16 %v1415, %v1414
        %v1429 = vpack.c.bf16 %v1417, %v1416
        %v1430 = vld [vmem:[%s5] sm:$0xf]
        %v1431 = vld [vmem:[%s5 + $0x4] sm:$0xf]
        %v1432 = vld [vmem:[%s5 + $0x8] sm:$0xf]
        %v1433 = vld [vmem:[%s5 + $0xc] sm:$0xf]
        %v1434 = vld [vmem:[%s5 + $0x10] sm:$0xf]
        %v1435 = vld [vmem:[%s5 + $0x14] sm:$0xf]
        %v1436 = vld [vmem:[%s5 + $0x18] sm:$0xf]
        %v1437 = vld [vmem:[%s5 + $0x1c] sm:$0xf]
        %v1438 = vld [vmem:[%s5 + $0x20] sm:$0xf]
        %v1439 = vld [vmem:[%s5 + $0x24] sm:$0xf]
        %v1440 = vld [vmem:[%s5 + $0x28] sm:$0xf]
        %v1441 = vld [vmem:[%s5 + $0x2c] sm:$0xf]
        %v1442 = vld [vmem:[%s5 + $0x30] sm:$0xf]
        %v1443 = vld [vmem:[%s5 + $0x34] sm:$0xf]
        %v1444 = vld [vmem:[%s5 + $0x38] sm:$0xf]
        %v1445 = vld [vmem:[%s5 + $0x3c] sm:$0xf]
        %v1446 = vld [vmem:[%s6] sm:$0x1]
        %v1448 = vlaneseq
        %v1449 = vshrl.u32 %v1448, 7
        %v1450 = vsub.s32 0, %v1449
        %v1451 = vrot.slane %v1446, %v1450
        %v1469 = vunpack.c.l.b16 %v1430
        %v1470 = vunpack.c.l.b16 %v1431
        %v1471 = vunpack.c.l.b16 %v1432
        %v1472 = vunpack.c.l.b16 %v1433
        %v1473 = vunpack.c.l.b16 %v1434
        %v1474 = vunpack.c.l.b16 %v1435
        %v1475 = vunpack.c.l.b16 %v1436
        %v1476 = vunpack.c.l.b16 %v1437
        %v1477 = vunpack.c.l.b16 %v1438
        %v1478 = vunpack.c.l.b16 %v1439
        %v1479 = vunpack.c.l.b16 %v1440
        %v1480 = vunpack.c.l.b16 %v1441
        %v1481 = vunpack.c.l.b16 %v1442
        %v1482 = vunpack.c.l.b16 %v1443
        %v1483 = vunpack.c.l.b16 %v1444
        %v1484 = vunpack.c.l.b16 %v1445
        %v1485 = vpack.c.b16 %v1470, %v1469
        %v1486 = vpack.c.b16 %v1472, %v1471
        %v1487 = vpack.c.b16 %v1474, %v1473
        %v1488 = vpack.c.b16 %v1476, %v1475
        %v1489 = vpack.c.b16 %v1478, %v1477
        %v1490 = vpack.c.b16 %v1480, %v1479
        %v1491 = vpack.c.b16 %v1482, %v1481
        %v1492 = vpack.c.b16 %v1484, %v1483
        %1501 = vmatprep.subr.bf16.mxu0 0
        %1502 = vmatpush1.bf16.msra.mxu0 %v1485
        %1503 = vmatprep.subr.bf16.mxu0 0
        %1504 = vmatpush1.bf16.msra.mxu0 %v1486
        %1505 = vmatprep.subr.bf16.mxu0 0
        %1506 = vmatpush1.bf16.msra.mxu0 %v1487
        %1507 = vmatprep.subr.bf16.mxu0 0
        %1508 = vmatpush1.bf16.msra.mxu0 %v1488
        %1509 = vmatprep.subr.bf16.mxu0 0
        %1510 = vmatpush1.bf16.msra.mxu0 %v1489
        %1511 = vmatprep.subr.bf16.mxu0 0
        %1512 = vmatpush1.bf16.msra.mxu0 %v1490
        %1513 = vmatprep.subr.bf16.mxu0 0
        %1514 = vmatpush1.bf16.msra.mxu0 %v1491
        %1515 = vmatprep.subr.bf16.mxu0 0
        %1516 = vmatpush1.bf16.msra.mxu0 %v1492
        %1517 = vmatprep.subr.bf16.mxu0 0
        %1518 = vmatpush1.bf16.msra.mxu0 0
        %1519 = vmatprep.subr.bf16.mxu0 0
        %1520 = vmatpush1.bf16.msra.mxu0 0
        %1521 = vmatprep.subr.bf16.mxu0 0
        %1522 = vmatpush1.bf16.msra.mxu0 0
        %1523 = vmatprep.subr.bf16.mxu0 0
        %1524 = vmatpush1.bf16.msra.mxu0 0
        %1525 = vmatprep.subr.bf16.mxu0 0
        %1526 = vmatpush1.bf16.msra.mxu0 0
        %1527 = vmatprep.subr.bf16.mxu0 0
        %1528 = vmatpush1.bf16.msra.mxu0 0
        %1529 = vmatprep.subr.bf16.mxu0 0
        %1530 = vmatpush1.bf16.msra.mxu0 0
        %1531 = vmatprep.subr.bf16.mxu0 0
        %1532 = vmatpush1.bf16.msra.mxu0 0
        %1533 = vmatprep.mubr.bf16.mxu0 0
        %1534 = vmatmul.mubr.bf16.gmra.mrb[0].mxu0 %v1426
        %v1535 = vpop.f32.mrb[0].mxu0
        %v1536 = vadd.f32 %v1451, %v1535
        %v1537 = vpop.f32.mrb[0].mxu0
        %v1538 = vpop.f32.mrb[0].mxu0
        %v1539 = vadd.f32 %v1451, %v1538
        %v1540 = vpop.f32.mrb[0].mxu0
        %1541 = vmatprep.mubr.bf16.mxu0 0
        %1542 = vmatmul.mubr.bf16.gmra.mrb[0].mxu0 %v1427
        %v1543 = vpop.f32.mrb[0].mxu0
        %v1544 = vadd.f32 %v1451, %v1543
        %v1545 = vpop.f32.mrb[0].mxu0
        %v1546 = vpop.f32.mrb[0].mxu0
        %v1547 = vadd.f32 %v1451, %v1546
        %v1548 = vpop.f32.mrb[0].mxu0
        %1549 = vmatprep.mubr.bf16.mxu0 0
        %1550 = vmatmul.mubr.bf16.gmra.mrb[0].mxu0 %v1428
        %v1551 = vpop.f32.mrb[0].mxu0
        %v1552 = vadd.f32 %v1451, %v1551
        %v1553 = vpop.f32.mrb[0].mxu0
        %v1554 = vpop.f32.mrb[0].mxu0
        %v1555 = vadd.f32 %v1451, %v1554
        %v1556 = vpop.f32.mrb[0].mxu0
        %1557 = vmatprep.mubr.bf16.mxu0 0
        %1558 = vmatmul.mubr.bf16.gmra.mrb[0].mxu0 %v1429
        %v1559 = vpop.f32.mrb[0].mxu0
        %v1560 = vadd.f32 %v1451, %v1559
        %v1561 = vpop.f32.mrb[0].mxu0
        %v1562 = vpop.f32.mrb[0].mxu0
        %v1563 = vadd.f32 %v1451, %v1562
        %v1564 = vpop.f32.mrb[0].mxu0
        %1565 = vdwg.mxu0
        %v1566 = vmul.f32 %v1418, %v1536
        %v1567 = vmul.f32 %v1419, %v1539
        %v1568 = vmul.f32 %v1420, %v1544
        %v1569 = vmul.f32 %v1421, %v1547
        %v1570 = vmul.f32 %v1422, %v1552
        %v1571 = vmul.f32 %v1423, %v1555
        %v1572 = vmul.f32 %v1424, %v1560
        %v1573 = vmul.f32 %v1425, %v1563
        %1574 = vst [vmem:[%s244] sm:$0xff] %v1566
        %1575 = vst [vmem:[%s244 + $0x8] sm:$0xff] %v1567
        %1576 = vst [vmem:[%s244 + $0x10] sm:$0xff] %v1568
        %1577 = vst [vmem:[%s244 + $0x18] sm:$0xff] %v1569
        %1578 = vst [vmem:[%s244 + $0x20] sm:$0xff] %v1570
        %1579 = vst [vmem:[%s244 + $0x28] sm:$0xff] %v1571
        %1580 = vst [vmem:[%s244 + $0x30] sm:$0xff] %v1572
        %1581 = vst [vmem:[%s244 + $0x38] sm:$0xff] %v1573
        %s1582 = sand.u32 %s169, 1
        %s1583 = scalar_lea.sflag [#allocation6], %s1582
        %s1584 = sand.u32 %s169, 1
        %s1585 = smul.addr %s1584, 64
        %s1586 = scalar_lea.vmem [#allocation5], %s1585
        // Predicated region
        $region81: #{lka_forward_nhwc.1} parent=43 // pred_check
          %p1587 = pneg %p179
        $region82: #{lka_forward_nhwc.1} parent=43 // pred_check_branch
          %1589 = sbr.rel (%p1587) target = $region84
        $region83: #{lka_forward_nhwc.1} parent=43 // pred_region
          %s1590 = smul.u32 4, %s26
          %s1592 = ssub.s32 1024, 1024
          %1593 = vsyncadd %s1583, %s1592
          %s1594 = smul.addr %s1590, 2
          %s1595 = smul.addr %s25, 32
          %s1596 = sadd.s32 %s1594, %s1595
          %s1597 = smul.addr %s1596, 128
          %s1598 = scalar_lea.hbm %s7, %s1597
          %s1599 = sshll.u32 %s1586, 4
          %s1600 = int_to_ptr.vmem [resolvable:$true] %s1599
          %1605 = dma.vmem_to_hbm [thread:$0]  %s1600, 1024, %s1598, %s1583, 128, 128, 8
        $region84: #{lka_forward_nhwc.1} parent=43 // pred_fallthru
          _
      $region44: #{lka_forward_nhwc.1} parent=5 // pred_fallthru
        _
      %p1606 = scmp.le.s32.totalorder 2, %s16
      // Predicated region
      $region85: #{lka_forward_nhwc.1} parent=5 // pred_check
        %p1607 = pneg %p1606
      $region86: #{lka_forward_nhwc.1} parent=5 // pred_check_branch
        %1609 = sbr.rel (%p1607) target = $region88
      $region87: #{lka_forward_nhwc.1} parent=5 // pred_region
        %s1610 = ssub.s32 %s16, 2
        // Predicated region
        $region89: #{lka_forward_nhwc.1} parent=87 // pred_check
          %p1611 = pneg %p185
        $region90: #{lka_forward_nhwc.1} parent=87 // pred_check_branch
          %1613 = sbr.rel (%p1611) target = $region92
        $region91: #{lka_forward_nhwc.1} parent=87 // pred_region
          %s1614 = sand.u32 %s170, 1
          %s1615 = scalar_lea.sflag [#allocation6], %s1614
          %s1616 = sand.u32 %s170, 1
          %s1617 = smul.addr %s1616, 64
          %s1618 = scalar_lea.vmem [#allocation5], %s1617
          %1619 = dma.done %s1615, 1024
        $region92: #{lka_forward_nhwc.1} parent=87 // pred_fallthru
          _
      $region88: #{lka_forward_nhwc.1} parent=5 // pred_fallthru
        _
    $region6: #{lka_forward_nhwc.1} parent=1 // loop_footer
      %s20 = sadd.s32 1, %s16
    $region7: #{lka_forward_nhwc.1} parent=1 // loop_footer_branch
      %15 = sbr.rel target = $region3
    $region8: #{lka_forward_nhwc.1} parent=1 // loop_exit
      _
    %1620 = vsyncpa [#allocation6], 1
    %s1621 = scalar_lea.sflag [#allocation6], 1
    %1622 = vsyncpa %s1621, 1
  %1623 = vsyncmov [#allocation4]
  %s1624 = vpop.sfrf %1623
  %p1625 = scmp.eq.s32.totalorder %s1624, 0
  %p1626 = pneg %p1625
  %1628 = shalt.err (%p1626)
  %s1629 = scalar_lea.sflag [#allocation4], 1
  %1630 = vsyncmov %s1629
  %s1631 = vpop.sfrf %1630
  %p1632 = scmp.eq.s32.totalorder %s1631, 0
  %p1633 = pneg %p1632
  %1635 = shalt.err (%p1633)
  %s1636 = scalar_lea.sflag [#allocation4], 2
  %1637 = vsyncmov %s1636
  %s1638 = vpop.sfrf %1637
  %p1639 = scmp.eq.s32.totalorder %s1638, 0
  %p1640 = pneg %p1639
  %1642 = shalt.err (%p1640)

</llo_original>
